<compile_context>
chip_gen: v7x
topology: tpu7x:2x2x1
jax: 0.10.0
libtpu: 0.0.40
codegen_flags: <defaults>
</compile_context>

<pallas_src>
import functools

import jax
import jax.numpy as jnp
from jax import lax
from jax.experimental import pallas as pl
from jax.experimental.pallas import tpu as pltpu


# ----------------------------- timm helper ---------------------------------
def make_divisible(v, divisor=8, min_value=None, round_limit=0.9):
    min_value = min_value or divisor
    new_v = max(min_value, int(v + divisor / 2) // divisor * divisor)
    if new_v < round_limit * v:
        new_v += divisor
    return new_v


KS = 7            # spatial_kernel_size
PAD = KS // 2


# ------------------------------ Pallas kernel ------------------------------
def _light_cbam_kernel(x_ref, w1t_ref, w2_ref, wc_ref, bc_ref, o_ref,
                       pad_ref, gate_ref, *, h, w, block_n):
    H, W = h, w
    HW = H * W
    inv_hw = 1.0 / float(HW)
    C = x_ref.shape[1]
    inv_c = 1.0 / float(C)
    pad_cols = pad_ref.shape[1]

    # Zero the padded conv-input scratch once per grid step; the inner
    # [PAD:PAD+H, PAD:PAD+W] slab is rewritten for every sample, the zero
    # border never changes.
    pad_ref[...] = jnp.zeros_like(pad_ref)

    w1t = w1t_ref[...].astype(jnp.float32)            # (C, R)  fc1 weight, transposed
    w2 = w2_ref[...].astype(jnp.float32)              # (C, R)  fc2 weight
    bias = bc_ref[0, 0]                                # BN-folded conv bias

    for n in range(block_n):                           # static unroll over batch block
        x = x_ref[n].astype(jnp.float32)               # (C, HW)  lane-dense

        # ---------------- LightChannelAttn ----------------
        pool = (0.5 * inv_hw) * jnp.sum(x, axis=1, keepdims=True) \
             + 0.5 * jnp.max(x, axis=1, keepdims=True)                      # (C, 1)
        hid = jnp.maximum(jnp.sum(w1t * pool, axis=0, keepdims=True), 0.0)  # (1, R)
        attn = jnp.sum(w2 * hid, axis=1, keepdims=True)                     # (C, 1)
        x_ca = x * jax.nn.sigmoid(attn)                # (C, HW) -- kept live, reused

        # ---------------- LightSpatialAttn ----------------
        s_row = (0.5 * inv_c) * jnp.sum(x_ca, axis=0, keepdims=True) \
              + 0.5 * jnp.max(x_ca, axis=0, keepdims=True)                  # (1, HW)

        # Scatter the flat spatial map into the zero-padded 2D scratch
        # (H small writes of width W; the only flat->2D relayout needed).
        for y in range(H):
            pad_ref[PAD + y:PAD + y + 1, PAD:PAD + W] = \
                s_row[0:1, y * W:(y + 1) * W]
        padded = pad_ref[...]                           # (pad_rows, pad_cols)

        # 7x7 conv (BN folded into wc/bc): 7 lane rolls + 49 sublane slices.
        acc = jnp.full((H, W), bias, jnp.float32)
        for dx in range(KS):
            if dx == 0:
                sh = padded
            else:
                # shifted[:, j] == padded[:, j + dx]  (np.roll convention)
                sh = pltpu.roll(padded, shift=pad_cols - dx, axis=1)
            for dy in range(KS):
                acc = acc + wc_ref[dy, dx] * sh[dy:dy + H, 0:W]
        gate2d = jax.nn.sigmoid(acc)                    # (H, W)

        # Back to the lane-dense flat layout for the fused output store.
        for y in range(H):
            gate_ref[0:1, y * W:(y + 1) * W] = gate2d[y:y + 1, :]

        o_ref[n] = (x_ca * gate_ref[...]).astype(o_ref.dtype)


def _pick_block_n(n, bytes_per_sample):
    # Aim for ~2 MiB input blocks, but keep at least 2 grid steps when the
    # batch allows it (v7x megacore), and cap the static per-block unroll.
    target = max(1, (2 * 1024 * 1024) // max(1, bytes_per_sample))
    cap = n if n < 2 else max(1, n // 2)
    bn = max(1, min(target, cap, 8))
    while n % bn:
        bn -= 1
    return bn


def light_cbam(x, w1, w2, wc, bc):
    N, C, H, W = x.shape
    HW = H * W
    R = w1.shape[0]
    assert W + 2 * PAD <= 128, "spatial width too large for the (., 128) conv scratch"
    # TODO(synk): for real CNN feature maps (e.g. 256x112x112) add an H-tiled
    # grid axis with carried pool partials / conv halo to fit v7x's 64 MiB VMEM.

    x_flat = jnp.reshape(x, (N, C, HW))                # lane-dense view (HW mult of 128 here)
    w1t = jnp.transpose(w1)                            # (C, R)

    block_n = _pick_block_n(N, C * HW * x.dtype.itemsize)
    grid = (N // block_n,)

    pad_rows = ((H + 2 * PAD + 7) // 8) * 8            # 24 for H=16
    pad_cols = 128

    kernel = functools.partial(_light_cbam_kernel, h=H, w=W, block_n=block_n)
    out_flat = pl.pallas_call(
        kernel,
        out_shape=jax.ShapeDtypeStruct((N, C, HW), x.dtype),
        grid_spec=pltpu.PrefetchScalarGridSpec(
            num_scalar_prefetch=0,
            grid=grid,
            in_specs=[
                pl.BlockSpec((block_n, C, HW), lambda n: (n, 0, 0)),     # x (lane-dense)
                pl.BlockSpec((C, R), lambda n: (0, 0)),                  # fc1 weight (transposed)
                pl.BlockSpec((C, R), lambda n: (0, 0)),                  # fc2 weight
                pl.BlockSpec(memory_space=pltpu.MemorySpace.SMEM),       # 7x7 conv weight (BN-folded)
                pl.BlockSpec(memory_space=pltpu.MemorySpace.SMEM),       # conv bias (BN-folded)
            ],
            out_specs=pl.BlockSpec((block_n, C, HW), lambda n: (n, 0, 0)),
            scratch_shapes=[
                pltpu.VMEM((pad_rows, pad_cols), jnp.float32),           # zero-padded conv input
                pltpu.VMEM((1, HW), jnp.float32),                        # flat spatial gate
            ],
        ),
        compiler_params=pltpu.CompilerParams(dimension_semantics=("parallel",)),
    )(x_flat, w1t, w2, wc, bc)
    return jnp.reshape(out_flat, (N, C, H, W))


# ------------------------------ pure-JAX reference -------------------------
def ref_forward(x, w1, w2, wc, bc):
    pool = 0.5 * x.mean((2, 3), keepdims=True) + 0.5 * x.max((2, 3), keepdims=True)
    h = jax.nn.relu(jnp.einsum("rc,ncij->nrij", w1, pool))
    a = jnp.einsum("cr,nrij->ncij", w2, h)
    x_ca = x * jax.nn.sigmoid(a)
    s = 0.5 * x_ca.mean(1, keepdims=True) + 0.5 * x_ca.max(1, keepdims=True)
    conv = lax.conv_general_dilated(
        s, wc.reshape(1, 1, KS, KS), (1, 1),
        padding=((PAD, PAD), (PAD, PAD)),
        dimension_numbers=("NCHW", "OIHW", "NCHW"))
    return x_ca * jax.nn.sigmoid(conv + bc.reshape(1, 1, 1, 1))


# ------------------------------ main ----------------------------------------
if __name__ == "__main__":
    N, C, H, W = 2, 32, 16, 16
    rd_ratio, rd_divisor = 1.0 / 16, 1
    R = make_divisible(C * rd_ratio, rd_divisor, round_limit=0.0)   # = 2

    key = jax.random.PRNGKey(0)
    kx, k1, k2, kc = jax.random.split(key, 4)

    x = jax.random.normal(kx, (N, C, H, W), jnp.float32)

    # Deterministic parameter init (mimicking Conv2d default uniform ranges).
    b1 = 1.0 / (C ** 0.5)
    w1 = jax.random.uniform(k1, (R, C), jnp.float32, -b1, b1)        # fc1: C -> R
    b2 = 1.0 / (R ** 0.5)
    w2 = jax.random.uniform(k2, (C, R), jnp.float32, -b2, b2)        # fc2: R -> C
    bcv = 1.0 / (KS * KS) ** 0.5
    wc_raw = jax.random.uniform(kc, (KS, KS), jnp.float32, -bcv, bcv)

    # Fold fresh-init BatchNorm2d(1) (gamma=1, beta=0, mean=0, var=1, eps=1e-5).
    eps = 1e-5
    bn_scale = 1.0 / jnp.sqrt(1.0 + eps)
    wc = wc_raw * bn_scale
    bc = jnp.zeros((1, 1), jnp.float32)

    out = jax.block_until_ready(light_cbam(x, w1, w2, wc, bc))
    ref = ref_forward(x, w1, w2, wc, bc)

    assert out.shape == (N, C, H, W)
    assert jnp.allclose(out, ref, atol=1e-4, rtol=1e-4), float(jnp.max(jnp.abs(out - ref)))
    print("KERNEL_OK")
</pallas_src>

<mosaic_0001>
module attributes {stable_mosaic.version = 11 : i64} {
  func.func @_light_cbam_kernel(%arg0: i32, %arg1: memref<1x32x256xf32, #tpu.memory_space<vmem>>, %arg2: memref<32x2xf32, #tpu.memory_space<vmem>>, %arg3: memref<32x2xf32, #tpu.memory_space<vmem>>, %arg4: memref<7x7xf32, #tpu.memory_space<smem>>, %arg5: memref<1x1xf32, #tpu.memory_space<smem>>, %arg6: memref<1x32x256xf32, #tpu.memory_space<vmem>>, %arg7: memref<24x128xf32, #tpu.memory_space<vmem>>, %arg8: memref<1x256xf32, #tpu.memory_space<vmem>>) attributes {dimension_semantics = [#tpu.dimension_semantics<parallel>], iteration_bounds = array<i64: 2>, scalar_prefetch = 0 : i64, scratch_operands = 2 : i64, tpu.core_type = #tpu.core_type<tc>, window_params = [{transform_indices = @transform_0, window_bounds = array<i64: 1, 32, 256>}, {pipeline_mode = #tpu.pipeline_mode<synchronous>, transform_indices = @transform_1, window_bounds = array<i64: 32, 2>}, {pipeline_mode = #tpu.pipeline_mode<synchronous>, transform_indices = @transform_2, window_bounds = array<i64: 32, 2>}, {transform_indices = @transform_3, window_bounds = array<i64: 7, 7>}, {transform_indices = @transform_4, window_bounds = array<i64: 1, 1>}, {transform_indices = @transform_5, window_bounds = array<i64: 1, 32, 256>}]} {
    %cst = arith.constant 0.000000e+00 : f32
    %0 = vector.broadcast %cst : f32 to vector<24x128xf32>
    %c0 = arith.constant 0 : index
    %c0_0 = arith.constant 0 : index
    %1 = vector.load %arg7[%c0, %c0_0] : memref<24x128xf32, #tpu.memory_space<vmem>>, vector<24x128xf32>
    tpu.vector_store %arg7[%c0, %c0_0], %0 {strides = array<i32>} : memref<24x128xf32, #tpu.memory_space<vmem>>, vector<24x128xf32>,
    %c0_1 = arith.constant 0 : index
    %c0_2 = arith.constant 0 : index
    %2 = vector.load %arg2[%c0_1, %c0_2] : memref<32x2xf32, #tpu.memory_space<vmem>>, vector<32x2xf32>
    %c0_3 = arith.constant 0 : index
    %c0_4 = arith.constant 0 : index
    %3 = vector.load %arg3[%c0_3, %c0_4] : memref<32x2xf32, #tpu.memory_space<vmem>>, vector<32x2xf32>
    %c0_5 = arith.constant 0 : index
    %c0_6 = arith.constant 0 : index
    %4 = memref.load %arg5[%c0_5, %c0_6] : memref<1x1xf32, #tpu.memory_space<smem>>
    %c0_7 = arith.constant 0 : index
    %c0_8 = arith.constant 0 : index
    %c0_9 = arith.constant 0 : index
    %5 = vector.load %arg1[%c0_7, %c0_8, %c0_9] : memref<1x32x256xf32, #tpu.memory_space<vmem>>, vector<1x32x256xf32>
    %6 = vector.shape_cast %5 : vector<1x32x256xf32> to vector<32x256xf32>
    %cst_10 = arith.constant dense<0.000000e+00> : vector<32xf32>
    %7 = vector.multi_reduction <add>, %6, %cst_10 [1] : vector<32x256xf32> to vector<32xf32>
    %8 = vector.shape_cast %7 : vector<32xf32> to vector<32x1xf32>
    %cst_11 = arith.constant 0.001953125 : f32
    %9 = vector.broadcast %cst_11 : f32 to vector<32x1xf32>
    %10 = arith.mulf %9, %8 : vector<32x1xf32>
    %cst_12 = arith.constant dense<0xFF800000> : vector<32xf32>
    %11 = vector.multi_reduction <maximumf>, %6, %cst_12 [1] : vector<32x256xf32> to vector<32xf32>
    %12 = vector.shape_cast %11 : vector<32xf32> to vector<32x1xf32>
    %cst_13 = arith.constant 5.000000e-01 : f32
    %13 = vector.broadcast %cst_13 : f32 to vector<32x1xf32>
    %14 = arith.mulf %13, %12 : vector<32x1xf32>
    %15 = arith.addf %10, %14 : vector<32x1xf32>
    %16 = vector.broadcast %15 : vector<32x1xf32> to vector<32x2xf32>
    %17 = arith.mulf %2, %16 : vector<32x2xf32>
    %cst_14 = arith.constant dense<0.000000e+00> : vector<2xf32>
    %18 = vector.multi_reduction <add>, %17, %cst_14 [0] : vector<32x2xf32> to vector<2xf32>
    %19 = vector.shape_cast %18 : vector<2xf32> to vector<1x2xf32>
    %cst_15 = arith.constant 0.000000e+00 : f32
    %20 = vector.broadcast %cst_15 : f32 to vector<1x2xf32>
    %21 = arith.maximumf %19, %20 : vector<1x2xf32>
    %22 = vector.broadcast %21 : vector<1x2xf32> to vector<32x2xf32>
    %23 = arith.mulf %3, %22 : vector<32x2xf32>
    %cst_16 = arith.constant dense<0.000000e+00> : vector<32xf32>
    %24 = vector.multi_reduction <add>, %23, %cst_16 [1] : vector<32x2xf32> to vector<32xf32>
    %25 = vector.shape_cast %24 : vector<32xf32> to vector<32x1xf32>
    %26 = arith.negf %25 : vector<32x1xf32>
    %27 = math.exp %26 : vector<32x1xf32>
    %cst_17 = arith.constant 1.000000e+00 : f32
    %28 = vector.broadcast %cst_17 : f32 to vector<32x1xf32>
    %29 = arith.addf %28, %27 : vector<32x1xf32>
    %30 = arith.divf %28, %29 : vector<32x1xf32>
    %31 = vector.broadcast %30 : vector<32x1xf32> to vector<32x256xf32>
    %32 = arith.mulf %6, %31 : vector<32x256xf32>
    %cst_18 = arith.constant dense<0.000000e+00> : vector<256xf32>
    %33 = vector.multi_reduction <add>, %32, %cst_18 [0] : vector<32x256xf32> to vector<256xf32>
    %34 = vector.shape_cast %33 : vector<256xf32> to vector<1x256xf32>
    %cst_19 = arith.constant 1.562500e-02 : f32
    %35 = vector.broadcast %cst_19 : f32 to vector<1x256xf32>
    %36 = arith.mulf %35, %34 : vector<1x256xf32>
    %cst_20 = arith.constant dense<0xFF800000> : vector<256xf32>
    %37 = vector.multi_reduction <maximumf>, %32, %cst_20 [0] : vector<32x256xf32> to vector<256xf32>
    %38 = vector.shape_cast %37 : vector<256xf32> to vector<1x256xf32>
    %cst_21 = arith.constant 5.000000e-01 : f32
    %39 = vector.broadcast %cst_21 : f32 to vector<1x256xf32>
    %40 = arith.mulf %39, %38 : vector<1x256xf32>
    %41 = arith.addf %36, %40 : vector<1x256xf32>
    %42 = vector.extract_strided_slice %41 {offsets = [0, 0], sizes = [1, 16], strides = [1, 1]} : vector<1x256xf32> to vector<1x16xf32>
    %c3 = arith.constant 3 : index
    %c3_22 = arith.constant 3 : index
    %43 = vector.load %arg7[%c3, %c3_22] : memref<24x128xf32, #tpu.memory_space<vmem>>, vector<1x16xf32>
    tpu.vector_store %arg7[%c3, %c3_22], %42 {strides = array<i32>} : memref<24x128xf32, #tpu.memory_space<vmem>>, vector<1x16xf32>,
    %44 = vector.extract_strided_slice %41 {offsets = [0, 16], sizes = [1, 16], strides = [1, 1]} : vector<1x256xf32> to vector<1x16xf32>
    %c4 = arith.constant 4 : index
    %c3_23 = arith.constant 3 : index
    %45 = vector.load %arg7[%c4, %c3_23] : memref<24x128xf32, #tpu.memory_space<vmem>>, vector<1x16xf32>
    tpu.vector_store %arg7[%c4, %c3_23], %44 {strides = array<i32>} : memref<24x128xf32, #tpu.memory_space<vmem>>, vector<1x16xf32>,
    %46 = vector.extract_strided_slice %41 {offsets = [0, 32], sizes = [1, 16], strides = [1, 1]} : vector<1x256xf32> to vector<1x16xf32>
    %c5 = arith.constant 5 : index
    %c3_24 = arith.constant 3 : index
    %47 = vector.load %arg7[%c5, %c3_24] : memref<24x128xf32, #tpu.memory_space<vmem>>, vector<1x16xf32>
    tpu.vector_store %arg7[%c5, %c3_24], %46 {strides = array<i32>} : memref<24x128xf32, #tpu.memory_space<vmem>>, vector<1x16xf32>,
    %48 = vector.extract_strided_slice %41 {offsets = [0, 48], sizes = [1, 16], strides = [1, 1]} : vector<1x256xf32> to vector<1x16xf32>
    %c6 = arith.constant 6 : index
    %c3_25 = arith.constant 3 : index
    %49 = vector.load %arg7[%c6, %c3_25] : memref<24x128xf32, #tpu.memory_space<vmem>>, vector<1x16xf32>
    tpu.vector_store %arg7[%c6, %c3_25], %48 {strides = array<i32>} : memref<24x128xf32, #tpu.memory_space<vmem>>, vector<1x16xf32>,
    %50 = vector.extract_strided_slice %41 {offsets = [0, 64], sizes = [1, 16], strides = [1, 1]} : vector<1x256xf32> to vector<1x16xf32>
    %c7 = arith.constant 7 : index
    %c3_26 = arith.constant 3 : index
    %51 = vector.load %arg7[%c7, %c3_26] : memref<24x128xf32, #tpu.memory_space<vmem>>, vector<1x16xf32>
    tpu.vector_store %arg7[%c7, %c3_26], %50 {strides = array<i32>} : memref<24x128xf32, #tpu.memory_space<vmem>>, vector<1x16xf32>,
    %52 = vector.extract_strided_slice %41 {offsets = [0, 80], sizes = [1, 16], strides = [1, 1]} : vector<1x256xf32> to vector<1x16xf32>
    %c8 = arith.constant 8 : index
    %c3_27 = arith.constant 3 : index
    %53 = vector.load %arg7[%c8, %c3_27] : memref<24x128xf32, #tpu.memory_space<vmem>>, vector<1x16xf32>
    tpu.vector_store %arg7[%c8, %c3_27], %52 {strides = array<i32>} : memref<24x128xf32, #tpu.memory_space<vmem>>, vector<1x16xf32>,
    %54 = vector.extract_strided_slice %41 {offsets = [0, 96], sizes = [1, 16], strides = [1, 1]} : vector<1x256xf32> to vector<1x16xf32>
    %c9 = arith.constant 9 : index
    %c3_28 = arith.constant 3 : index
    %55 = vector.load %arg7[%c9, %c3_28] : memref<24x128xf32, #tpu.memory_space<vmem>>, vector<1x16xf32>
    tpu.vector_store %arg7[%c9, %c3_28], %54 {strides = array<i32>} : memref<24x128xf32, #tpu.memory_space<vmem>>, vector<1x16xf32>,
    %56 = vector.extract_strided_slice %41 {offsets = [0, 112], sizes = [1, 16], strides = [1, 1]} : vector<1x256xf32> to vector<1x16xf32>
    %c10 = arith.constant 10 : index
    %c3_29 = arith.constant 3 : index
    %57 = vector.load %arg7[%c10, %c3_29] : memref<24x128xf32, #tpu.memory_space<vmem>>, vector<1x16xf32>
    tpu.vector_store %arg7[%c10, %c3_29], %56 {strides = array<i32>} : memref<24x128xf32, #tpu.memory_space<vmem>>, vector<1x16xf32>,
    %58 = vector.extract_strided_slice %41 {offsets = [0, 128], sizes = [1, 16], strides = [1, 1]} : vector<1x256xf32> to vector<1x16xf32>
    %c11 = arith.constant 11 : index
    %c3_30 = arith.constant 3 : index
    %59 = vector.load %arg7[%c11, %c3_30] : memref<24x128xf32, #tpu.memory_space<vmem>>, vector<1x16xf32>
    tpu.vector_store %arg7[%c11, %c3_30], %58 {strides = array<i32>} : memref<24x128xf32, #tpu.memory_space<vmem>>, vector<1x16xf32>,
    %60 = vector.extract_strided_slice %41 {offsets = [0, 144], sizes = [1, 16], strides = [1, 1]} : vector<1x256xf32> to vector<1x16xf32>
    %c12 = arith.constant 12 : index
    %c3_31 = arith.constant 3 : index
    %61 = vector.load %arg7[%c12, %c3_31] : memref<24x128xf32, #tpu.memory_space<vmem>>, vector<1x16xf32>
    tpu.vector_store %arg7[%c12, %c3_31], %60 {strides = array<i32>} : memref<24x128xf32, #tpu.memory_space<vmem>>, vector<1x16xf32>,
    %62 = vector.extract_strided_slice %41 {offsets = [0, 160], sizes = [1, 16], strides = [1, 1]} : vector<1x256xf32> to vector<1x16xf32>
    %c13 = arith.constant 13 : index
    %c3_32 = arith.constant 3 : index
    %63 = vector.load %arg7[%c13, %c3_32] : memref<24x128xf32, #tpu.memory_space<vmem>>, vector<1x16xf32>
    tpu.vector_store %arg7[%c13, %c3_32], %62 {strides = array<i32>} : memref<24x128xf32, #tpu.memory_space<vmem>>, vector<1x16xf32>,
    %64 = vector.extract_strided_slice %41 {offsets = [0, 176], sizes = [1, 16], strides = [1, 1]} : vector<1x256xf32> to vector<1x16xf32>
    %c14 = arith.constant 14 : index
    %c3_33 = arith.constant 3 : index
    %65 = vector.load %arg7[%c14, %c3_33] : memref<24x128xf32, #tpu.memory_space<vmem>>, vector<1x16xf32>
    tpu.vector_store %arg7[%c14, %c3_33], %64 {strides = array<i32>} : memref<24x128xf32, #tpu.memory_space<vmem>>, vector<1x16xf32>,
    %66 = vector.extract_strided_slice %41 {offsets = [0, 192], sizes = [1, 16], strides = [1, 1]} : vector<1x256xf32> to vector<1x16xf32>
    %c15 = arith.constant 15 : index
    %c3_34 = arith.constant 3 : index
    %67 = vector.load %arg7[%c15, %c3_34] : memref<24x128xf32, #tpu.memory_space<vmem>>, vector<1x16xf32>
    tpu.vector_store %arg7[%c15, %c3_34], %66 {strides = array<i32>} : memref<24x128xf32, #tpu.memory_space<vmem>>, vector<1x16xf32>,
    %68 = vector.extract_strided_slice %41 {offsets = [0, 208], sizes = [1, 16], strides = [1, 1]} : vector<1x256xf32> to vector<1x16xf32>
    %c16 = arith.constant 16 : index
    %c3_35 = arith.constant 3 : index
    %69 = vector.load %arg7[%c16, %c3_35] : memref<24x128xf32, #tpu.memory_space<vmem>>, vector<1x16xf32>
    tpu.vector_store %arg7[%c16, %c3_35], %68 {strides = array<i32>} : memref<24x128xf32, #tpu.memory_space<vmem>>, vector<1x16xf32>,
    %70 = vector.extract_strided_slice %41 {offsets = [0, 224], sizes = [1, 16], strides = [1, 1]} : vector<1x256xf32> to vector<1x16xf32>
    %c17 = arith.constant 17 : index
    %c3_36 = arith.constant 3 : index
    %71 = vector.load %arg7[%c17, %c3_36] : memref<24x128xf32, #tpu.memory_space<vmem>>, vector<1x16xf32>
    tpu.vector_store %arg7[%c17, %c3_36], %70 {strides = array<i32>} : memref<24x128xf32, #tpu.memory_space<vmem>>, vector<1x16xf32>,
    %72 = vector.extract_strided_slice %41 {offsets = [0, 240], sizes = [1, 16], strides = [1, 1]} : vector<1x256xf32> to vector<1x16xf32>
    %c18 = arith.constant 18 : index
    %c3_37 = arith.constant 3 : index
    %73 = vector.load %arg7[%c18, %c3_37] : memref<24x128xf32, #tpu.memory_space<vmem>>, vector<1x16xf32>
    tpu.vector_store %arg7[%c18, %c3_37], %72 {strides = array<i32>} : memref<24x128xf32, #tpu.memory_space<vmem>>, vector<1x16xf32>,
    %c0_38 = arith.constant 0 : index
    %c0_39 = arith.constant 0 : index
    %74 = vector.load %arg7[%c0_38, %c0_39] : memref<24x128xf32, #tpu.memory_space<vmem>>, vector<24x128xf32>
    %75 = vector.broadcast %4 : f32 to vector<16x16xf32>
    %c0_40 = arith.constant 0 : index
    %c0_41 = arith.constant 0 : index
    %76 = memref.load %arg4[%c0_40, %c0_41] : memref<7x7xf32, #tpu.memory_space<smem>>
    %77 = vector.extract_strided_slice %74 {offsets = [0, 0], sizes = [16, 16], strides = [1, 1]} : vector<24x128xf32> to vector<16x16xf32>
    %78 = vector.broadcast %76 : f32 to vector<16x16xf32>
    %79 = arith.mulf %78, %77 : vector<16x16xf32>
    %80 = arith.addf %75, %79 : vector<16x16xf32>
    %c1 = arith.constant 1 : index
    %c0_42 = arith.constant 0 : index
    %81 = memref.load %arg4[%c1, %c0_42] : memref<7x7xf32, #tpu.memory_space<smem>>
    %82 = vector.extract_strided_slice %74 {offsets = [1, 0], sizes = [16, 16], strides = [1, 1]} : vector<24x128xf32> to vector<16x16xf32>
    %83 = vector.broadcast %81 : f32 to vector<16x16xf32>
    %84 = arith.mulf %83, %82 : vector<16x16xf32>
    %85 = arith.addf %80, %84 : vector<16x16xf32>
    %c2 = arith.constant 2 : index
    %c0_43 = arith.constant 0 : index
    %86 = memref.load %arg4[%c2, %c0_43] : memref<7x7xf32, #tpu.memory_space<smem>>
    %87 = vector.extract_strided_slice %74 {offsets = [2, 0], sizes = [16, 16], strides = [1, 1]} : vector<24x128xf32> to vector<16x16xf32>
    %88 = vector.broadcast %86 : f32 to vector<16x16xf32>
    %89 = arith.mulf %88, %87 : vector<16x16xf32>
    %90 = arith.addf %85, %89 : vector<16x16xf32>
    %c3_44 = arith.constant 3 : index
    %c0_45 = arith.constant 0 : index
    %91 = memref.load %arg4[%c3_44, %c0_45] : memref<7x7xf32, #tpu.memory_space<smem>>
    %92 = vector.extract_strided_slice %74 {offsets = [3, 0], sizes = [16, 16], strides = [1, 1]} : vector<24x128xf32> to vector<16x16xf32>
    %93 = vector.broadcast %91 : f32 to vector<16x16xf32>
    %94 = arith.mulf %93, %92 : vector<16x16xf32>
    %95 = arith.addf %90, %94 : vector<16x16xf32>
    %c4_46 = arith.constant 4 : index
    %c0_47 = arith.constant 0 : index
    %96 = memref.load %arg4[%c4_46, %c0_47] : memref<7x7xf32, #tpu.memory_space<smem>>
    %97 = vector.extract_strided_slice %74 {offsets = [4, 0], sizes = [16, 16], strides = [1, 1]} : vector<24x128xf32> to vector<16x16xf32>
    %98 = vector.broadcast %96 : f32 to vector<16x16xf32>
    %99 = arith.mulf %98, %97 : vector<16x16xf32>
    %100 = arith.addf %95, %99 : vector<16x16xf32>
    %c5_48 = arith.constant 5 : index
    %c0_49 = arith.constant 0 : index
    %101 = memref.load %arg4[%c5_48, %c0_49] : memref<7x7xf32, #tpu.memory_space<smem>>
    %102 = vector.extract_strided_slice %74 {offsets = [5, 0], sizes = [16, 16], strides = [1, 1]} : vector<24x128xf32> to vector<16x16xf32>
    %103 = vector.broadcast %101 : f32 to vector<16x16xf32>
    %104 = arith.mulf %103, %102 : vector<16x16xf32>
    %105 = arith.addf %100, %104 : vector<16x16xf32>
    %c6_50 = arith.constant 6 : index
    %c0_51 = arith.constant 0 : index
    %106 = memref.load %arg4[%c6_50, %c0_51] : memref<7x7xf32, #tpu.memory_space<smem>>
    %107 = vector.extract_strided_slice %74 {offsets = [6, 0], sizes = [16, 16], strides = [1, 1]} : vector<24x128xf32> to vector<16x16xf32>
    %108 = vector.broadcast %106 : f32 to vector<16x16xf32>
    %109 = arith.mulf %108, %107 : vector<16x16xf32>
    %110 = arith.addf %105, %109 : vector<16x16xf32>
    %c127_i32 = arith.constant 127 : i32
    %111 = tpu.dynamic_rotate %74 by %c127_i32 dim 1 : vector<24x128xf32>, i32 -> vector<24x128xf32>
    %c0_52 = arith.constant 0 : index
    %c1_53 = arith.constant 1 : index
    %112 = memref.load %arg4[%c0_52, %c1_53] : memref<7x7xf32, #tpu.memory_space<smem>>
    %113 = vector.extract_strided_slice %111 {offsets = [0, 0], sizes = [16, 16], strides = [1, 1]} : vector<24x128xf32> to vector<16x16xf32>
    %114 = vector.broadcast %112 : f32 to vector<16x16xf32>
    %115 = arith.mulf %114, %113 : vector<16x16xf32>
    %116 = arith.addf %110, %115 : vector<16x16xf32>
    %c1_54 = arith.constant 1 : index
    %c1_55 = arith.constant 1 : index
    %117 = memref.load %arg4[%c1_54, %c1_55] : memref<7x7xf32, #tpu.memory_space<smem>>
    %118 = vector.extract_strided_slice %111 {offsets = [1, 0], sizes = [16, 16], strides = [1, 1]} : vector<24x128xf32> to vector<16x16xf32>
    %119 = vector.broadcast %117 : f32 to vector<16x16xf32>
    %120 = arith.mulf %119, %118 : vector<16x16xf32>
    %121 = arith.addf %116, %120 : vector<16x16xf32>
    %c2_56 = arith.constant 2 : index
    %c1_57 = arith.constant 1 : index
    %122 = memref.load %arg4[%c2_56, %c1_57] : memref<7x7xf32, #tpu.memory_space<smem>>
    %123 = vector.extract_strided_slice %111 {offsets = [2, 0], sizes = [16, 16], strides = [1, 1]} : vector<24x128xf32> to vector<16x16xf32>
    %124 = vector.broadcast %122 : f32 to vector<16x16xf32>
    %125 = arith.mulf %124, %123 : vector<16x16xf32>
    %126 = arith.addf %121, %125 : vector<16x16xf32>
    %c3_58 = arith.constant 3 : index
    %c1_59 = arith.constant 1 : index
    %127 = memref.load %arg4[%c3_58, %c1_59] : memref<7x7xf32, #tpu.memory_space<smem>>
    %128 = vector.extract_strided_slice %111 {offsets = [3, 0], sizes = [16, 16], strides = [1, 1]} : vector<24x128xf32> to vector<16x16xf32>
    %129 = vector.broadcast %127 : f32 to vector<16x16xf32>
    %130 = arith.mulf %129, %128 : vector<16x16xf32>
    %131 = arith.addf %126, %130 : vector<16x16xf32>
    %c4_60 = arith.constant 4 : index
    %c1_61 = arith.constant 1 : index
    %132 = memref.load %arg4[%c4_60, %c1_61] : memref<7x7xf32, #tpu.memory_space<smem>>
    %133 = vector.extract_strided_slice %111 {offsets = [4, 0], sizes = [16, 16], strides = [1, 1]} : vector<24x128xf32> to vector<16x16xf32>
    %134 = vector.broadcast %132 : f32 to vector<16x16xf32>
    %135 = arith.mulf %134, %133 : vector<16x16xf32>
    %136 = arith.addf %131, %135 : vector<16x16xf32>
    %c5_62 = arith.constant 5 : index
    %c1_63 = arith.constant 1 : index
    %137 = memref.load %arg4[%c5_62, %c1_63] : memref<7x7xf32, #tpu.memory_space<smem>>
    %138 = vector.extract_strided_slice %111 {offsets = [5, 0], sizes = [16, 16], strides = [1, 1]} : vector<24x128xf32> to vector<16x16xf32>
    %139 = vector.broadcast %137 : f32 to vector<16x16xf32>
    %140 = arith.mulf %139, %138 : vector<16x16xf32>
    %141 = arith.addf %136, %140 : vector<16x16xf32>
    %c6_64 = arith.constant 6 : index
    %c1_65 = arith.constant 1 : index
    %142 = memref.load %arg4[%c6_64, %c1_65] : memref<7x7xf32, #tpu.memory_space<smem>>
    %143 = vector.extract_strided_slice %111 {offsets = [6, 0], sizes = [16, 16], strides = [1, 1]} : vector<24x128xf32> to vector<16x16xf32>
    %144 = vector.broadcast %142 : f32 to vector<16x16xf32>
    %145 = arith.mulf %144, %143 : vector<16x16xf32>
    %146 = arith.addf %141, %145 : vector<16x16xf32>
    %c126_i32 = arith.constant 126 : i32
    %147 = tpu.dynamic_rotate %74 by %c126_i32 dim 1 : vector<24x128xf32>, i32 -> vector<24x128xf32>
    %c0_66 = arith.constant 0 : index
    %c2_67 = arith.constant 2 : index
    %148 = memref.load %arg4[%c0_66, %c2_67] : memref<7x7xf32, #tpu.memory_space<smem>>
    %149 = vector.extract_strided_slice %147 {offsets = [0, 0], sizes = [16, 16], strides = [1, 1]} : vector<24x128xf32> to vector<16x16xf32>
    %150 = vector.broadcast %148 : f32 to vector<16x16xf32>
    %151 = arith.mulf %150, %149 : vector<16x16xf32>
    %152 = arith.addf %146, %151 : vector<16x16xf32>
    %c1_68 = arith.constant 1 : index
    %c2_69 = arith.constant 2 : index
    %153 = memref.load %arg4[%c1_68, %c2_69] : memref<7x7xf32, #tpu.memory_space<smem>>
    %154 = vector.extract_strided_slice %147 {offsets = [1, 0], sizes = [16, 16], strides = [1, 1]} : vector<24x128xf32> to vector<16x16xf32>
    %155 = vector.broadcast %153 : f32 to vector<16x16xf32>
    %156 = arith.mulf %155, %154 : vector<16x16xf32>
    %157 = arith.addf %152, %156 : vector<16x16xf32>
    %c2_70 = arith.constant 2 : index
    %c2_71 = arith.constant 2 : index
    %158 = memref.load %arg4[%c2_70, %c2_71] : memref<7x7xf32, #tpu.memory_space<smem>>
    %159 = vector.extract_strided_slice %147 {offsets = [2, 0], sizes = [16, 16], strides = [1, 1]} : vector<24x128xf32> to vector<16x16xf32>
    %160 = vector.broadcast %158 : f32 to vector<16x16xf32>
    %161 = arith.mulf %160, %159 : vector<16x16xf32>
    %162 = arith.addf %157, %161 : vector<16x16xf32>
    %c3_72 = arith.constant 3 : index
    %c2_73 = arith.constant 2 : index
    %163 = memref.load %arg4[%c3_72, %c2_73] : memref<7x7xf32, #tpu.memory_space<smem>>
    %164 = vector.extract_strided_slice %147 {offsets = [3, 0], sizes = [16, 16], strides = [1, 1]} : vector<24x128xf32> to vector<16x16xf32>
    %165 = vector.broadcast %163 : f32 to vector<16x16xf32>
    %166 = arith.mulf %165, %164 : vector<16x16xf32>
    %167 = arith.addf %162, %166 : vector<16x16xf32>
    %c4_74 = arith.constant 4 : index
    %c2_75 = arith.constant 2 : index
    %168 = memref.load %arg4[%c4_74, %c2_75] : memref<7x7xf32, #tpu.memory_space<smem>>
    %169 = vector.extract_strided_slice %147 {offsets = [4, 0], sizes = [16, 16], strides = [1, 1]} : vector<24x128xf32> to vector<16x16xf32>
    %170 = vector.broadcast %168 : f32 to vector<16x16xf32>
    %171 = arith.mulf %170, %169 : vector<16x16xf32>
    %172 = arith.addf %167, %171 : vector<16x16xf32>
    %c5_76 = arith.constant 5 : index
    %c2_77 = arith.constant 2 : index
    %173 = memref.load %arg4[%c5_76, %c2_77] : memref<7x7xf32, #tpu.memory_space<smem>>
    %174 = vector.extract_strided_slice %147 {offsets = [5, 0], sizes = [16, 16], strides = [1, 1]} : vector<24x128xf32> to vector<16x16xf32>
    %175 = vector.broadcast %173 : f32 to vector<16x16xf32>
    %176 = arith.mulf %175, %174 : vector<16x16xf32>
    %177 = arith.addf %172, %176 : vector<16x16xf32>
    %c6_78 = arith.constant 6 : index
    %c2_79 = arith.constant 2 : index
    %178 = memref.load %arg4[%c6_78, %c2_79] : memref<7x7xf32, #tpu.memory_space<smem>>
    %179 = vector.extract_strided_slice %147 {offsets = [6, 0], sizes = [16, 16], strides = [1, 1]} : vector<24x128xf32> to vector<16x16xf32>
    %180 = vector.broadcast %178 : f32 to vector<16x16xf32>
    %181 = arith.mulf %180, %179 : vector<16x16xf32>
    %182 = arith.addf %177, %181 : vector<16x16xf32>
    %c125_i32 = arith.constant 125 : i32
    %183 = tpu.dynamic_rotate %74 by %c125_i32 dim 1 : vector<24x128xf32>, i32 -> vector<24x128xf32>
    %c0_80 = arith.constant 0 : index
    %c3_81 = arith.constant 3 : index
    %184 = memref.load %arg4[%c0_80, %c3_81] : memref<7x7xf32, #tpu.memory_space<smem>>
    %185 = vector.extract_strided_slice %183 {offsets = [0, 0], sizes = [16, 16], strides = [1, 1]} : vector<24x128xf32> to vector<16x16xf32>
    %186 = vector.broadcast %184 : f32 to vector<16x16xf32>
    %187 = arith.mulf %186, %185 : vector<16x16xf32>
    %188 = arith.addf %182, %187 : vector<16x16xf32>
    %c1_82 = arith.constant 1 : index
    %c3_83 = arith.constant 3 : index
    %189 = memref.load %arg4[%c1_82, %c3_83] : memref<7x7xf32, #tpu.memory_space<smem>>
    %190 = vector.extract_strided_slice %183 {offsets = [1, 0], sizes = [16, 16], strides = [1, 1]} : vector<24x128xf32> to vector<16x16xf32>
    %191 = vector.broadcast %189 : f32 to vector<16x16xf32>
    %192 = arith.mulf %191, %190 : vector<16x16xf32>
    %193 = arith.addf %188, %192 : vector<16x16xf32>
    %c2_84 = arith.constant 2 : index
    %c3_85 = arith.constant 3 : index
    %194 = memref.load %arg4[%c2_84, %c3_85] : memref<7x7xf32, #tpu.memory_space<smem>>
    %195 = vector.extract_strided_slice %183 {offsets = [2, 0], sizes = [16, 16], strides = [1, 1]} : vector<24x128xf32> to vector<16x16xf32>
    %196 = vector.broadcast %194 : f32 to vector<16x16xf32>
    %197 = arith.mulf %196, %195 : vector<16x16xf32>
    %198 = arith.addf %193, %197 : vector<16x16xf32>
    %c3_86 = arith.constant 3 : index
    %c3_87 = arith.constant 3 : index
    %199 = memref.load %arg4[%c3_86, %c3_87] : memref<7x7xf32, #tpu.memory_space<smem>>
    %200 = vector.extract_strided_slice %183 {offsets = [3, 0], sizes = [16, 16], strides = [1, 1]} : vector<24x128xf32> to vector<16x16xf32>
    %201 = vector.broadcast %199 : f32 to vector<16x16xf32>
    %202 = arith.mulf %201, %200 : vector<16x16xf32>
    %203 = arith.addf %198, %202 : vector<16x16xf32>
    %c4_88 = arith.constant 4 : index
    %c3_89 = arith.constant 3 : index
    %204 = memref.load %arg4[%c4_88, %c3_89] : memref<7x7xf32, #tpu.memory_space<smem>>
    %205 = vector.extract_strided_slice %183 {offsets = [4, 0], sizes = [16, 16], strides = [1, 1]} : vector<24x128xf32> to vector<16x16xf32>
    %206 = vector.broadcast %204 : f32 to vector<16x16xf32>
    %207 = arith.mulf %206, %205 : vector<16x16xf32>
    %208 = arith.addf %203, %207 : vector<16x16xf32>
    %c5_90 = arith.constant 5 : index
    %c3_91 = arith.constant 3 : index
    %209 = memref.load %arg4[%c5_90, %c3_91] : memref<7x7xf32, #tpu.memory_space<smem>>
    %210 = vector.extract_strided_slice %183 {offsets = [5, 0], sizes = [16, 16], strides = [1, 1]} : vector<24x128xf32> to vector<16x16xf32>
    %211 = vector.broadcast %209 : f32 to vector<16x16xf32>
    %212 = arith.mulf %211, %210 : vector<16x16xf32>
    %213 = arith.addf %208, %212 : vector<16x16xf32>
    %c6_92 = arith.constant 6 : index
    %c3_93 = arith.constant 3 : index
    %214 = memref.load %arg4[%c6_92, %c3_93] : memref<7x7xf32, #tpu.memory_space<smem>>
    %215 = vector.extract_strided_slice %183 {offsets = [6, 0], sizes = [16, 16], strides = [1, 1]} : vector<24x128xf32> to vector<16x16xf32>
    %216 = vector.broadcast %214 : f32 to vector<16x16xf32>
    %217 = arith.mulf %216, %215 : vector<16x16xf32>
    %218 = arith.addf %213, %217 : vector<16x16xf32>
    %c124_i32 = arith.constant 124 : i32
    %219 = tpu.dynamic_rotate %74 by %c124_i32 dim 1 : vector<24x128xf32>, i32 -> vector<24x128xf32>
    %c0_94 = arith.constant 0 : index
    %c4_95 = arith.constant 4 : index
    %220 = memref.load %arg4[%c0_94, %c4_95] : memref<7x7xf32, #tpu.memory_space<smem>>
    %221 = vector.extract_strided_slice %219 {offsets = [0, 0], sizes = [16, 16], strides = [1, 1]} : vector<24x128xf32> to vector<16x16xf32>
    %222 = vector.broadcast %220 : f32 to vector<16x16xf32>
    %223 = arith.mulf %222, %221 : vector<16x16xf32>
    %224 = arith.addf %218, %223 : vector<16x16xf32>
    %c1_96 = arith.constant 1 : index
    %c4_97 = arith.constant 4 : index
    %225 = memref.load %arg4[%c1_96, %c4_97] : memref<7x7xf32, #tpu.memory_space<smem>>
    %226 = vector.extract_strided_slice %219 {offsets = [1, 0], sizes = [16, 16], strides = [1, 1]} : vector<24x128xf32> to vector<16x16xf32>
    %227 = vector.broadcast %225 : f32 to vector<16x16xf32>
    %228 = arith.mulf %227, %226 : vector<16x16xf32>
    %229 = arith.addf %224, %228 : vector<16x16xf32>
    %c2_98 = arith.constant 2 : index
    %c4_99 = arith.constant 4 : index
    %230 = memref.load %arg4[%c2_98, %c4_99] : memref<7x7xf32, #tpu.memory_space<smem>>
    %231 = vector.extract_strided_slice %219 {offsets = [2, 0], sizes = [16, 16], strides = [1, 1]} : vector<24x128xf32> to vector<16x16xf32>
    %232 = vector.broadcast %230 : f32 to vector<16x16xf32>
    %233 = arith.mulf %232, %231 : vector<16x16xf32>
    %234 = arith.addf %229, %233 : vector<16x16xf32>
    %c3_100 = arith.constant 3 : index
    %c4_101 = arith.constant 4 : index
    %235 = memref.load %arg4[%c3_100, %c4_101] : memref<7x7xf32, #tpu.memory_space<smem>>
    %236 = vector.extract_strided_slice %219 {offsets = [3, 0], sizes = [16, 16], strides = [1, 1]} : vector<24x128xf32> to vector<16x16xf32>
    %237 = vector.broadcast %235 : f32 to vector<16x16xf32>
    %238 = arith.mulf %237, %236 : vector<16x16xf32>
    %239 = arith.addf %234, %238 : vector<16x16xf32>
    %c4_102 = arith.constant 4 : index
    %c4_103 = arith.constant 4 : index
    %240 = memref.load %arg4[%c4_102, %c4_103] : memref<7x7xf32, #tpu.memory_space<smem>>
    %241 = vector.extract_strided_slice %219 {offsets = [4, 0], sizes = [16, 16], strides = [1, 1]} : vector<24x128xf32> to vector<16x16xf32>
    %242 = vector.broadcast %240 : f32 to vector<16x16xf32>
    %243 = arith.mulf %242, %241 : vector<16x16xf32>
    %244 = arith.addf %239, %243 : vector<16x16xf32>
    %c5_104 = arith.constant 5 : index
    %c4_105 = arith.constant 4 : index
    %245 = memref.load %arg4[%c5_104, %c4_105] : memref<7x7xf32, #tpu.memory_space<smem>>
    %246 = vector.extract_strided_slice %219 {offsets = [5, 0], sizes = [16, 16], strides = [1, 1]} : vector<24x128xf32> to vector<16x16xf32>
    %247 = vector.broadcast %245 : f32 to vector<16x16xf32>
    %248 = arith.mulf %247, %246 : vector<16x16xf32>
    %249 = arith.addf %244, %248 : vector<16x16xf32>
    %c6_106 = arith.constant 6 : index
    %c4_107 = arith.constant 4 : index
    %250 = memref.load %arg4[%c6_106, %c4_107] : memref<7x7xf32, #tpu.memory_space<smem>>
    %251 = vector.extract_strided_slice %219 {offsets = [6, 0], sizes = [16, 16], strides = [1, 1]} : vector<24x128xf32> to vector<16x16xf32>
    %252 = vector.broadcast %250 : f32 to vector<16x16xf32>
    %253 = arith.mulf %252, %251 : vector<16x16xf32>
    %254 = arith.addf %249, %253 : vector<16x16xf32>
    %c123_i32 = arith.constant 123 : i32
    %255 = tpu.dynamic_rotate %74 by %c123_i32 dim 1 : vector<24x128xf32>, i32 -> vector<24x128xf32>
    %c0_108 = arith.constant 0 : index
    %c5_109 = arith.constant 5 : index
    %256 = memref.load %arg4[%c0_108, %c5_109] : memref<7x7xf32, #tpu.memory_space<smem>>
    %257 = vector.extract_strided_slice %255 {offsets = [0, 0], sizes = [16, 16], strides = [1, 1]} : vector<24x128xf32> to vector<16x16xf32>
    %258 = vector.broadcast %256 : f32 to vector<16x16xf32>
    %259 = arith.mulf %258, %257 : vector<16x16xf32>
    %260 = arith.addf %254, %259 : vector<16x16xf32>
    %c1_110 = arith.constant 1 : index
    %c5_111 = arith.constant 5 : index
    %261 = memref.load %arg4[%c1_110, %c5_111] : memref<7x7xf32, #tpu.memory_space<smem>>
    %262 = vector.extract_strided_slice %255 {offsets = [1, 0], sizes = [16, 16], strides = [1, 1]} : vector<24x128xf32> to vector<16x16xf32>
    %263 = vector.broadcast %261 : f32 to vector<16x16xf32>
    %264 = arith.mulf %263, %262 : vector<16x16xf32>
    %265 = arith.addf %260, %264 : vector<16x16xf32>
    %c2_112 = arith.constant 2 : index
    %c5_113 = arith.constant 5 : index
    %266 = memref.load %arg4[%c2_112, %c5_113] : memref<7x7xf32, #tpu.memory_space<smem>>
    %267 = vector.extract_strided_slice %255 {offsets = [2, 0], sizes = [16, 16], strides = [1, 1]} : vector<24x128xf32> to vector<16x16xf32>
    %268 = vector.broadcast %266 : f32 to vector<16x16xf32>
    %269 = arith.mulf %268, %267 : vector<16x16xf32>
    %270 = arith.addf %265, %269 : vector<16x16xf32>
    %c3_114 = arith.constant 3 : index
    %c5_115 = arith.constant 5 : index
    %271 = memref.load %arg4[%c3_114, %c5_115] : memref<7x7xf32, #tpu.memory_space<smem>>
    %272 = vector.extract_strided_slice %255 {offsets = [3, 0], sizes = [16, 16], strides = [1, 1]} : vector<24x128xf32> to vector<16x16xf32>
    %273 = vector.broadcast %271 : f32 to vector<16x16xf32>
    %274 = arith.mulf %273, %272 : vector<16x16xf32>
    %275 = arith.addf %270, %274 : vector<16x16xf32>
    %c4_116 = arith.constant 4 : index
    %c5_117 = arith.constant 5 : index
    %276 = memref.load %arg4[%c4_116, %c5_117] : memref<7x7xf32, #tpu.memory_space<smem>>
    %277 = vector.extract_strided_slice %255 {offsets = [4, 0], sizes = [16, 16], strides = [1, 1]} : vector<24x128xf32> to vector<16x16xf32>
    %278 = vector.broadcast %276 : f32 to vector<16x16xf32>
    %279 = arith.mulf %278, %277 : vector<16x16xf32>
    %280 = arith.addf %275, %279 : vector<16x16xf32>
    %c5_118 = arith.constant 5 : index
    %c5_119 = arith.constant 5 : index
    %281 = memref.load %arg4[%c5_118, %c5_119] : memref<7x7xf32, #tpu.memory_space<smem>>
    %282 = vector.extract_strided_slice %255 {offsets = [5, 0], sizes = [16, 16], strides = [1, 1]} : vector<24x128xf32> to vector<16x16xf32>
    %283 = vector.broadcast %281 : f32 to vector<16x16xf32>
    %284 = arith.mulf %283, %282 : vector<16x16xf32>
    %285 = arith.addf %280, %284 : vector<16x16xf32>
    %c6_120 = arith.constant 6 : index
    %c5_121 = arith.constant 5 : index
    %286 = memref.load %arg4[%c6_120, %c5_121] : memref<7x7xf32, #tpu.memory_space<smem>>
    %287 = vector.extract_strided_slice %255 {offsets = [6, 0], sizes = [16, 16], strides = [1, 1]} : vector<24x128xf32> to vector<16x16xf32>
    %288 = vector.broadcast %286 : f32 to vector<16x16xf32>
    %289 = arith.mulf %288, %287 : vector<16x16xf32>
    %290 = arith.addf %285, %289 : vector<16x16xf32>
    %c122_i32 = arith.constant 122 : i32
    %291 = tpu.dynamic_rotate %74 by %c122_i32 dim 1 : vector<24x128xf32>, i32 -> vector<24x128xf32>
    %c0_122 = arith.constant 0 : index
    %c6_123 = arith.constant 6 : index
    %292 = memref.load %arg4[%c0_122, %c6_123] : memref<7x7xf32, #tpu.memory_space<smem>>
    %293 = vector.extract_strided_slice %291 {offsets = [0, 0], sizes = [16, 16], strides = [1, 1]} : vector<24x128xf32> to vector<16x16xf32>
    %294 = vector.broadcast %292 : f32 to vector<16x16xf32>
    %295 = arith.mulf %294, %293 : vector<16x16xf32>
    %296 = arith.addf %290, %295 : vector<16x16xf32>
    %c1_124 = arith.constant 1 : index
    %c6_125 = arith.constant 6 : index
    %297 = memref.load %arg4[%c1_124, %c6_125] : memref<7x7xf32, #tpu.memory_space<smem>>
    %298 = vector.extract_strided_slice %291 {offsets = [1, 0], sizes = [16, 16], strides = [1, 1]} : vector<24x128xf32> to vector<16x16xf32>
    %299 = vector.broadcast %297 : f32 to vector<16x16xf32>
    %300 = arith.mulf %299, %298 : vector<16x16xf32>
    %301 = arith.addf %296, %300 : vector<16x16xf32>
    %c2_126 = arith.constant 2 : index
    %c6_127 = arith.constant 6 : index
    %302 = memref.load %arg4[%c2_126, %c6_127] : memref<7x7xf32, #tpu.memory_space<smem>>
    %303 = vector.extract_strided_slice %291 {offsets = [2, 0], sizes = [16, 16], strides = [1, 1]} : vector<24x128xf32> to vector<16x16xf32>
    %304 = vector.broadcast %302 : f32 to vector<16x16xf32>
    %305 = arith.mulf %304, %303 : vector<16x16xf32>
    %306 = arith.addf %301, %305 : vector<16x16xf32>
    %c3_128 = arith.constant 3 : index
    %c6_129 = arith.constant 6 : index
    %307 = memref.load %arg4[%c3_128, %c6_129] : memref<7x7xf32, #tpu.memory_space<smem>>
    %308 = vector.extract_strided_slice %291 {offsets = [3, 0], sizes = [16, 16], strides = [1, 1]} : vector<24x128xf32> to vector<16x16xf32>
    %309 = vector.broadcast %307 : f32 to vector<16x16xf32>
    %310 = arith.mulf %309, %308 : vector<16x16xf32>
    %311 = arith.addf %306, %310 : vector<16x16xf32>
    %c4_130 = arith.constant 4 : index
    %c6_131 = arith.constant 6 : index
    %312 = memref.load %arg4[%c4_130, %c6_131] : memref<7x7xf32, #tpu.memory_space<smem>>
    %313 = vector.extract_strided_slice %291 {offsets = [4, 0], sizes = [16, 16], strides = [1, 1]} : vector<24x128xf32> to vector<16x16xf32>
    %314 = vector.broadcast %312 : f32 to vector<16x16xf32>
    %315 = arith.mulf %314, %313 : vector<16x16xf32>
    %316 = arith.addf %311, %315 : vector<16x16xf32>
    %c5_132 = arith.constant 5 : index
    %c6_133 = arith.constant 6 : index
    %317 = memref.load %arg4[%c5_132, %c6_133] : memref<7x7xf32, #tpu.memory_space<smem>>
    %318 = vector.extract_strided_slice %291 {offsets = [5, 0], sizes = [16, 16], strides = [1, 1]} : vector<24x128xf32> to vector<16x16xf32>
    %319 = vector.broadcast %317 : f32 to vector<16x16xf32>
    %320 = arith.mulf %319, %318 : vector<16x16xf32>
    %321 = arith.addf %316, %320 : vector<16x16xf32>
    %c6_134 = arith.constant 6 : index
    %c6_135 = arith.constant 6 : index
    %322 = memref.load %arg4[%c6_134, %c6_135] : memref<7x7xf32, #tpu.memory_space<smem>>
    %323 = vector.extract_strided_slice %291 {offsets = [6, 0], sizes = [16, 16], strides = [1, 1]} : vector<24x128xf32> to vector<16x16xf32>
    %324 = vector.broadcast %322 : f32 to vector<16x16xf32>
    %325 = arith.mulf %324, %323 : vector<16x16xf32>
    %326 = arith.addf %321, %325 : vector<16x16xf32>
    %327 = arith.negf %326 : vector<16x16xf32>
    %328 = math.exp %327 : vector<16x16xf32>
    %cst_136 = arith.constant 1.000000e+00 : f32
    %329 = vector.broadcast %cst_136 : f32 to vector<16x16xf32>
    %330 = arith.addf %329, %328 : vector<16x16xf32>
    %331 = arith.divf %329, %330 : vector<16x16xf32>
    %332 = vector.extract_strided_slice %331 {offsets = [0, 0], sizes = [1, 16], strides = [1, 1]} : vector<16x16xf32> to vector<1x16xf32>
    %c0_137 = arith.constant 0 : index
    %c0_138 = arith.constant 0 : index
    %333 = vector.load %arg8[%c0_137, %c0_138] : memref<1x256xf32, #tpu.memory_space<vmem>>, vector<1x16xf32>
    tpu.vector_store %arg8[%c0_137, %c0_138], %332 {strides = array<i32>} : memref<1x256xf32, #tpu.memory_space<vmem>>, vector<1x16xf32>,
    %334 = vector.extract_strided_slice %331 {offsets = [1, 0], sizes = [1, 16], strides = [1, 1]} : vector<16x16xf32> to vector<1x16xf32>
    %c0_139 = arith.constant 0 : index
    %c16_140 = arith.constant 16 : index
    %335 = vector.load %arg8[%c0_139, %c16_140] : memref<1x256xf32, #tpu.memory_space<vmem>>, vector<1x16xf32>
    tpu.vector_store %arg8[%c0_139, %c16_140], %334 {strides = array<i32>} : memref<1x256xf32, #tpu.memory_space<vmem>>, vector<1x16xf32>,
    %336 = vector.extract_strided_slice %331 {offsets = [2, 0], sizes = [1, 16], strides = [1, 1]} : vector<16x16xf32> to vector<1x16xf32>
    %c0_141 = arith.constant 0 : index
    %c32 = arith.constant 32 : index
    %337 = vector.load %arg8[%c0_141, %c32] : memref<1x256xf32, #tpu.memory_space<vmem>>, vector<1x16xf32>
    tpu.vector_store %arg8[%c0_141, %c32], %336 {strides = array<i32>} : memref<1x256xf32, #tpu.memory_space<vmem>>, vector<1x16xf32>,
    %338 = vector.extract_strided_slice %331 {offsets = [3, 0], sizes = [1, 16], strides = [1, 1]} : vector<16x16xf32> to vector<1x16xf32>
    %c0_142 = arith.constant 0 : index
    %c48 = arith.constant 48 : index
    %339 = vector.load %arg8[%c0_142, %c48] : memref<1x256xf32, #tpu.memory_space<vmem>>, vector<1x16xf32>
    tpu.vector_store %arg8[%c0_142, %c48], %338 {strides = array<i32>} : memref<1x256xf32, #tpu.memory_space<vmem>>, vector<1x16xf32>,
    %340 = vector.extract_strided_slice %331 {offsets = [4, 0], sizes = [1, 16], strides = [1, 1]} : vector<16x16xf32> to vector<1x16xf32>
    %c0_143 = arith.constant 0 : index
    %c64 = arith.constant 64 : index
    %341 = vector.load %arg8[%c0_143, %c64] : memref<1x256xf32, #tpu.memory_space<vmem>>, vector<1x16xf32>
    tpu.vector_store %arg8[%c0_143, %c64], %340 {strides = array<i32>} : memref<1x256xf32, #tpu.memory_space<vmem>>, vector<1x16xf32>,
    %342 = vector.extract_strided_slice %331 {offsets = [5, 0], sizes = [1, 16], strides = [1, 1]} : vector<16x16xf32> to vector<1x16xf32>
    %c0_144 = arith.constant 0 : index
    %c80 = arith.constant 80 : index
    %343 = vector.load %arg8[%c0_144, %c80] : memref<1x256xf32, #tpu.memory_space<vmem>>, vector<1x16xf32>
    tpu.vector_store %arg8[%c0_144, %c80], %342 {strides = array<i32>} : memref<1x256xf32, #tpu.memory_space<vmem>>, vector<1x16xf32>,
    %344 = vector.extract_strided_slice %331 {offsets = [6, 0], sizes = [1, 16], strides = [1, 1]} : vector<16x16xf32> to vector<1x16xf32>
    %c0_145 = arith.constant 0 : index
    %c96 = arith.constant 96 : index
    %345 = vector.load %arg8[%c0_145, %c96] : memref<1x256xf32, #tpu.memory_space<vmem>>, vector<1x16xf32>
    tpu.vector_store %arg8[%c0_145, %c96], %344 {strides = array<i32>} : memref<1x256xf32, #tpu.memory_space<vmem>>, vector<1x16xf32>,
    %346 = vector.extract_strided_slice %331 {offsets = [7, 0], sizes = [1, 16], strides = [1, 1]} : vector<16x16xf32> to vector<1x16xf32>
    %c0_146 = arith.constant 0 : index
    %c112 = arith.constant 112 : index
    %347 = vector.load %arg8[%c0_146, %c112] : memref<1x256xf32, #tpu.memory_space<vmem>>, vector<1x16xf32>
    tpu.vector_store %arg8[%c0_146, %c112], %346 {strides = array<i32>} : memref<1x256xf32, #tpu.memory_space<vmem>>, vector<1x16xf32>,
    %348 = vector.extract_strided_slice %331 {offsets = [8, 0], sizes = [1, 16], strides = [1, 1]} : vector<16x16xf32> to vector<1x16xf32>
    %c0_147 = arith.constant 0 : index
    %c128 = arith.constant 128 : index
    %349 = vector.load %arg8[%c0_147, %c128] : memref<1x256xf32, #tpu.memory_space<vmem>>, vector<1x16xf32>
    tpu.vector_store %arg8[%c0_147, %c128], %348 {strides = array<i32>} : memref<1x256xf32, #tpu.memory_space<vmem>>, vector<1x16xf32>,
    %350 = vector.extract_strided_slice %331 {offsets = [9, 0], sizes = [1, 16], strides = [1, 1]} : vector<16x16xf32> to vector<1x16xf32>
    %c0_148 = arith.constant 0 : index
    %c144 = arith.constant 144 : index
    %351 = vector.load %arg8[%c0_148, %c144] : memref<1x256xf32, #tpu.memory_space<vmem>>, vector<1x16xf32>
    tpu.vector_store %arg8[%c0_148, %c144], %350 {strides = array<i32>} : memref<1x256xf32, #tpu.memory_space<vmem>>, vector<1x16xf32>,
    %352 = vector.extract_strided_slice %331 {offsets = [10, 0], sizes = [1, 16], strides = [1, 1]} : vector<16x16xf32> to vector<1x16xf32>
    %c0_149 = arith.constant 0 : index
    %c160 = arith.constant 160 : index
    %353 = vector.load %arg8[%c0_149, %c160] : memref<1x256xf32, #tpu.memory_space<vmem>>, vector<1x16xf32>
    tpu.vector_store %arg8[%c0_149, %c160], %352 {strides = array<i32>} : memref<1x256xf32, #tpu.memory_space<vmem>>, vector<1x16xf32>,
    %354 = vector.extract_strided_slice %331 {offsets = [11, 0], sizes = [1, 16], strides = [1, 1]} : vector<16x16xf32> to vector<1x16xf32>
    %c0_150 = arith.constant 0 : index
    %c176 = arith.constant 176 : index
    %355 = vector.load %arg8[%c0_150, %c176] : memref<1x256xf32, #tpu.memory_space<vmem>>, vector<1x16xf32>
    tpu.vector_store %arg8[%c0_150, %c176], %354 {strides = array<i32>} : memref<1x256xf32, #tpu.memory_space<vmem>>, vector<1x16xf32>,
    %356 = vector.extract_strided_slice %331 {offsets = [12, 0], sizes = [1, 16], strides = [1, 1]} : vector<16x16xf32> to vector<1x16xf32>
    %c0_151 = arith.constant 0 : index
    %c192 = arith.constant 192 : index
    %357 = vector.load %arg8[%c0_151, %c192] : memref<1x256xf32, #tpu.memory_space<vmem>>, vector<1x16xf32>
    tpu.vector_store %arg8[%c0_151, %c192], %356 {strides = array<i32>} : memref<1x256xf32, #tpu.memory_space<vmem>>, vector<1x16xf32>,
    %358 = vector.extract_strided_slice %331 {offsets = [13, 0], sizes = [1, 16], strides = [1, 1]} : vector<16x16xf32> to vector<1x16xf32>
    %c0_152 = arith.constant 0 : index
    %c208 = arith.constant 208 : index
    %359 = vector.load %arg8[%c0_152, %c208] : memref<1x256xf32, #tpu.memory_space<vmem>>, vector<1x16xf32>
    tpu.vector_store %arg8[%c0_152, %c208], %358 {strides = array<i32>} : memref<1x256xf32, #tpu.memory_space<vmem>>, vector<1x16xf32>,
    %360 = vector.extract_strided_slice %331 {offsets = [14, 0], sizes = [1, 16], strides = [1, 1]} : vector<16x16xf32> to vector<1x16xf32>
    %c0_153 = arith.constant 0 : index
    %c224 = arith.constant 224 : index
    %361 = vector.load %arg8[%c0_153, %c224] : memref<1x256xf32, #tpu.memory_space<vmem>>, vector<1x16xf32>
    tpu.vector_store %arg8[%c0_153, %c224], %360 {strides = array<i32>} : memref<1x256xf32, #tpu.memory_space<vmem>>, vector<1x16xf32>,
    %362 = vector.extract_strided_slice %331 {offsets = [15, 0], sizes = [1, 16], strides = [1, 1]} : vector<16x16xf32> to vector<1x16xf32>
    %c0_154 = arith.constant 0 : index
    %c240 = arith.constant 240 : index
    %363 = vector.load %arg8[%c0_154, %c240] : memref<1x256xf32, #tpu.memory_space<vmem>>, vector<1x16xf32>
    tpu.vector_store %arg8[%c0_154, %c240], %362 {strides = array<i32>} : memref<1x256xf32, #tpu.memory_space<vmem>>, vector<1x16xf32>,
    %c0_155 = arith.constant 0 : index
    %c0_156 = arith.constant 0 : index
    %364 = vector.load %arg8[%c0_155, %c0_156] : memref<1x256xf32, #tpu.memory_space<vmem>>, vector<1x256xf32>
    %365 = vector.broadcast %364 : vector<1x256xf32> to vector<32x256xf32>
    %366 = arith.mulf %32, %365 : vector<32x256xf32>
    %c0_157 = arith.constant 0 : index
    %c0_158 = arith.constant 0 : index
    %c0_159 = arith.constant 0 : index
    %367 = vector.load %arg6[%c0_157, %c0_158, %c0_159] : memref<1x32x256xf32, #tpu.memory_space<vmem>>, vector<1x32x256xf32>
    %368 = vector.shape_cast %367 : vector<1x32x256xf32> to vector<32x256xf32>
    %369 = vector.shape_cast %366 : vector<32x256xf32> to vector<1x32x256xf32>
    tpu.vector_store %arg6[%c0_157, %c0_158, %c0_159], %369 {strides = array<i32>} : memref<1x32x256xf32, #tpu.memory_space<vmem>>, vector<1x32x256xf32>,
    return
  }
  func.func @transform_0(%arg0: i32) -> (i32, i32, i32) {
    %c0_i32 = arith.constant 0 : i32
    %c0_i32_0 = arith.constant 0 : i32
    %c0_i32_1 = arith.constant 0 : i32
    return %arg0, %c0_i32, %c0_i32_0 : i32, i32, i32
  }
  func.func @transform_1(%arg0: i32) -> (i32, i32) {
    %c0_i32 = arith.constant 0 : i32
    %c0_i32_0 = arith.constant 0 : i32
    %c0_i32_1 = arith.constant 0 : i32
    return %c0_i32, %c0_i32_0 : i32, i32
  }
  func.func @transform_2(%arg0: i32) -> (i32, i32) {
    %c0_i32 = arith.constant 0 : i32
    %c0_i32_0 = arith.constant 0 : i32
    %c0_i32_1 = arith.constant 0 : i32
    return %c0_i32, %c0_i32_0 : i32, i32
  }
  func.func @transform_3(%arg0: i32) -> (i32, i32) {
    %c0_i32 = arith.constant 0 : i32
    %c0_i32_0 = arith.constant 0 : i32
    %c0_i32_1 = arith.constant 0 : i32
    return %c0_i32, %c0_i32_0 : i32, i32
  }
  func.func @transform_4(%arg0: i32) -> (i32, i32) {
    %c0_i32 = arith.constant 0 : i32
    %c0_i32_0 = arith.constant 0 : i32
    %c0_i32_1 = arith.constant 0 : i32
    return %c0_i32, %c0_i32_0 : i32, i32
  }
  func.func @transform_5(%arg0: i32) -> (i32, i32, i32) {
    %c0_i32 = arith.constant 0 : i32
    %c0_i32_0 = arith.constant 0 : i32
    %c0_i32_1 = arith.constant 0 : i32
    return %arg0, %c0_i32, %c0_i32_0 : i32, i32, i32
  }
}

</mosaic_0001>

<llo_original>
// kernel: tpu_custom_call.1
$region0: #{tpu_custom_call.1}
  #allocation0 [shape = 'u32[]', space=smem, size = 0x4, offset = 0x4, fixed_abs, tag = 'smem constant byte address 0x4 - core index']
  #allocation1 [shape = 'u32[144,128]{1,0:T(1,128)}', space=vmem, size = 0x12000, scoped, tag = 'internal scratch']
  #allocation2 [shape = 'f32[24,128]{1,0:T(8,128)}', space=vmem, size = 0x3000, scoped, tag = 'scratch operand']
  #allocation3 [shape = 'f32[1,256]{1,0:T(1,128)}', space=vmem, size = 0x400, scoped, tag = 'scratch operand']
  #allocation4 [shape = 'f32[1,1]{1,0:T(1,128)S(6)}', space=smem, size = 0x200, scoped, tag = 'scoped memory for tpu_custom_call.1']
  %s0 = inlined_call_operand.hbm [shape: f32[2,32,256], index: 0, kind: input, shape index: {}]
  %s1 = inlined_call_operand.vmem [shape: f32[32,2], index: 1, kind: input, shape index: {}]
  %s2 = inlined_call_operand.vmem [shape: f32[32,2], index: 2, kind: input, shape index: {}]
  %s3 = inlined_call_operand.vmem [shape: f32[7,7], index: 3, kind: input, shape index: {}]
  %s4 = inlined_call_operand.<no memory space> [shape: f32[1,1], index: 4, kind: input, shape index: {}]
  %s5 = inlined_call_operand.hbm [shape: f32[2,32,256], index: 5, kind: output, shape index: {}]
  %s6 = sld [smem:[#allocation0]]
  $region61: #{tpu_custom_call.1} parent=0
    _
  %s8 = ssub.s32 1, %s6
  %s9 = scalar_select 0, %s8, %s6
  %10 = sst [smem:[#allocation4]] %s4
  $region1: #{tpu_custom_call.1} parent=0
    #allocation5 [shape = 'u8[65536]{0}', space=vmem, size = 0x10000, scoped, tag = 'input window, operand 0']
    #allocation6 [shape = 's32[2]{0}', space=sflag, size = 0x8, scoped, tag = 'scoped memory for tpu_custom_call.1']
    #allocation7 [shape = 's32[2]{0}', space=sflag, size = 0x8, scoped, tag = 'scoped memory for tpu_custom_call.1']
    #allocation8 [shape = 's32[2]{0}', space=sflag, size = 0x8, scoped, tag = 'scoped memory for tpu_custom_call.1']
    #allocation9 [shape = 'u8[4096]{0}', space=smem, size = 0x1000, scoped, tag = 'input window, operand 3, single buffered']
    #allocation10 [shape = 'u8[65536]{0}', space=vmem, size = 0x10000, scoped, tag = 'output window, operand 0']
    %11 = vsyncpa [#allocation6], 0
    %s12 = scalar_lea.sflag [#allocation6], 1
    %13 = vsyncpa %s12, 0
    %14 = vsyncpa [#allocation8], 0
    %15 = vsyncpa [#allocation7], 0
    %s16 = scalar_lea.sflag [#allocation7], 1
    %17 = vsyncpa %s16, 0
    loop: start=0, step=1, limit=4
    $region2: #{tpu_custom_call.1} parent=1 // loop_pre_header
      _
    $region3: #{tpu_custom_call.1} parent=1 // loop_header
      %s19 = sphi 0, %s23
      %p20 = scmp.ge.s32.totalorder %s19, 4
      %s29 = sphi 0, %s31
      %s32 = sphi 0, %s29
      %s33 = sphi 0, %s32
      %s49 = sphi 0, %s33
      %s53 = sphi 0, %s53
      %s55 = sphi 0, %s53
      %s56 = sphi 0, %s55
      %s70 = sphi 0, %s56
      %s74 = sphi 0, %s74
      %s76 = sphi 0, %s74
      %s77 = sphi 0, %s76
      %s91 = sphi 0, %s77
      %s95 = sphi 0, %s95
      %s97 = sphi 0, %s95
      %s98 = sphi 0, %s97
      %s112 = sphi 0, %s98
      %s116 = sphi 0, %s116
      %s118 = sphi 0, %s116
      %s119 = sphi 0, %s118
      %s133 = sphi 0, %s119
      %s139 = sphi 0, %s141
      %s142 = sphi 0, %s139
      %s143 = sphi 0, %s142
      %s159 = sphi 0, %s143
    $region4: #{tpu_custom_call.1} parent=1 // loop_header_branch
      %22 = sbr.rel (%p20) target = $region8
    $region5: #{tpu_custom_call.1} parent=1 // loop_body
      %s24 = ssub.s32 %s19, 1
      %s25 = ssub.s32 %s19, 2
      %s26 = sadd.s32 %s19, 1
      %s27 = ssub.s32 %s19, %s26
      %p28 = scmp.eq.s32.totalorder %s27, 0
      %s30 = sadd.s32 %s29, 1
      %s31 = scalar_select %p28, %s29, %s30
      %p34 = pneg %p28
      %p35 = scmp.eq.s32.totalorder %s19, 1
      %p36 = por %p34, %p35
      %p37 = scmp.ne.s32.totalorder %s29, %s32
      %p38 = scmp.eq.s32.totalorder %s19, 0
      %p39 = por %p37, %p38
      %p40 = scmp.ne.s32.totalorder %s29, %s32
      %p41 = scmp.eq.s32.totalorder %s24, 1
      %p42 = por %p40, %p41
      %p43 = scmp.ne.s32.totalorder %s32, %s33
      %p44 = scmp.eq.s32.totalorder %s24, 0
      %p45 = por %p43, %p44
      %p46 = scmp.ne.s32.totalorder %s32, %s33
      %p47 = scmp.eq.s32.totalorder %s25, 1
      %p48 = por %p46, %p47
      %p50 = scmp.ne.s32.totalorder %s33, %s49
      %p51 = scmp.eq.s32.totalorder %s25, 0
      %p52 = por %p50, %p51
      %s54 = sadd.s32 %s53, 1
      %p57 = scmp.eq.s32.totalorder %s19, 1
      %p58 = scmp.ne.s32.totalorder %s53, %s55
      %p59 = scmp.eq.s32.totalorder %s19, 0
      %p60 = por %p58, %p59
      %p61 = scmp.ne.s32.totalorder %s53, %s55
      %p62 = scmp.eq.s32.totalorder %s24, 1
      %p63 = por %p61, %p62
      %p64 = scmp.ne.s32.totalorder %s55, %s56
      %p65 = scmp.eq.s32.totalorder %s24, 0
      %p66 = por %p64, %p65
      %p67 = scmp.ne.s32.totalorder %s55, %s56
      %p68 = scmp.eq.s32.totalorder %s25, 1
      %p69 = por %p67, %p68
      %p71 = scmp.ne.s32.totalorder %s56, %s70
      %p72 = scmp.eq.s32.totalorder %s25, 0
      %p73 = por %p71, %p72
      %s75 = sadd.s32 %s74, 1
      %p78 = scmp.eq.s32.totalorder %s19, 1
      %p79 = scmp.ne.s32.totalorder %s74, %s76
      %p80 = scmp.eq.s32.totalorder %s19, 0
      %p81 = por %p79, %p80
      %p82 = scmp.ne.s32.totalorder %s74, %s76
      %p83 = scmp.eq.s32.totalorder %s24, 1
      %p84 = por %p82, %p83
      %p85 = scmp.ne.s32.totalorder %s76, %s77
      %p86 = scmp.eq.s32.totalorder %s24, 0
      %p87 = por %p85, %p86
      %p88 = scmp.ne.s32.totalorder %s76, %s77
      %p89 = scmp.eq.s32.totalorder %s25, 1
      %p90 = por %p88, %p89
      %p92 = scmp.ne.s32.totalorder %s77, %s91
      %p93 = scmp.eq.s32.totalorder %s25, 0
      %p94 = por %p92, %p93
      %s96 = sadd.s32 %s95, 1
      %p99 = scmp.eq.s32.totalorder %s19, 1
      %p100 = scmp.ne.s32.totalorder %s95, %s97
      %p101 = scmp.eq.s32.totalorder %s19, 0
      %p102 = por %p100, %p101
      %p103 = scmp.ne.s32.totalorder %s95, %s97
      %p104 = scmp.eq.s32.totalorder %s24, 1
      %p105 = por %p103, %p104
      %p106 = scmp.ne.s32.totalorder %s97, %s98
      %p107 = scmp.eq.s32.totalorder %s24, 0
      %p108 = por %p106, %p107
      %p109 = scmp.ne.s32.totalorder %s97, %s98
      %p110 = scmp.eq.s32.totalorder %s25, 1
      %p111 = por %p109, %p110
      %p113 = scmp.ne.s32.totalorder %s98, %s112
      %p114 = scmp.eq.s32.totalorder %s25, 0
      %p115 = por %p113, %p114
      %s117 = sadd.s32 %s116, 1
      %p120 = scmp.eq.s32.totalorder %s19, 1
      %p121 = scmp.ne.s32.totalorder %s116, %s118
      %p122 = scmp.eq.s32.totalorder %s19, 0
      %p123 = por %p121, %p122
      %p124 = scmp.ne.s32.totalorder %s116, %s118
      %p125 = scmp.eq.s32.totalorder %s24, 1
      %p126 = por %p124, %p125
      %p127 = scmp.ne.s32.totalorder %s118, %s119
      %p128 = scmp.eq.s32.totalorder %s24, 0
      %p129 = por %p127, %p128
      %p130 = scmp.ne.s32.totalorder %s118, %s119
      %p131 = scmp.eq.s32.totalorder %s25, 1
      %p132 = por %p130, %p131
      %p134 = scmp.ne.s32.totalorder %s119, %s133
      %p135 = scmp.eq.s32.totalorder %s25, 0
      %p136 = por %p134, %p135
      %s137 = ssub.s32 %s19, %s26
      %p138 = scmp.eq.s32.totalorder %s137, 0
      %s140 = sadd.s32 %s139, 1
      %s141 = scalar_select %p138, %s139, %s140
      %p144 = pneg %p138
      %p145 = scmp.eq.s32.totalorder %s19, 1
      %p146 = por %p144, %p145
      %p147 = scmp.ne.s32.totalorder %s139, %s142
      %p148 = scmp.eq.s32.totalorder %s19, 0
      %p149 = por %p147, %p148
      %p150 = scmp.ne.s32.totalorder %s139, %s142
      %p151 = scmp.eq.s32.totalorder %s24, 1
      %p152 = por %p150, %p151
      %p153 = scmp.ne.s32.totalorder %s142, %s143
      %p154 = scmp.eq.s32.totalorder %s24, 0
      %p155 = por %p153, %p154
      %p156 = scmp.ne.s32.totalorder %s142, %s143
      %p157 = scmp.eq.s32.totalorder %s25, 1
      %p158 = por %p156, %p157
      %p160 = scmp.ne.s32.totalorder %s143, %s159
      %p161 = scmp.eq.s32.totalorder %s25, 0
      %p162 = por %p160, %p161
      %p163 = scmp.le.s32.totalorder 1, %s19
      %p164 = scmp.lt.s32.totalorder %s19, 3
      %p165 = pnand %p163, %p164
      %p166 = pneg %p165
      // Predicated region
      $region9: #{tpu_custom_call.1} parent=5 // pred_check
        _
      $region10: #{tpu_custom_call.1} parent=5 // pred_check_branch
        %168 = sbr.rel (%p165) target = $region12
      $region11: #{tpu_custom_call.1} parent=5 // pred_region
        %s169 = ssub.s32 %s19, 1
        // Predicated region
        $region13: #{tpu_custom_call.1} parent=11 // pred_check
          %p170 = pneg %p66
        $region14: #{tpu_custom_call.1} parent=11 // pred_check_branch
          %172 = sbr.rel (%p170) target = $region16
        $region15: #{tpu_custom_call.1} parent=11 // pred_region
          _
        $region16: #{tpu_custom_call.1} parent=11 // pred_fallthru
          _
        // Predicated region
        $region17: #{tpu_custom_call.1} parent=11 // pred_check
          %p173 = pneg %p87
        $region18: #{tpu_custom_call.1} parent=11 // pred_check_branch
          %175 = sbr.rel (%p173) target = $region20
        $region19: #{tpu_custom_call.1} parent=11 // pred_region
          _
        $region20: #{tpu_custom_call.1} parent=11 // pred_fallthru
          _
        // Predicated region
        $region21: #{tpu_custom_call.1} parent=11 // pred_check
          %p176 = pneg %p108
        $region22: #{tpu_custom_call.1} parent=11 // pred_check_branch
          %178 = sbr.rel (%p176) target = $region24
        $region23: #{tpu_custom_call.1} parent=11 // pred_region
          %s180 = ssub.s32 128, 128
          %181 = vsyncadd [#allocation8], %s180
          %s183 = sshll.u32 %s3, 4
          %s184 = int_to_ptr.vmem [resolvable:$true] %s183
          %186 = dma.vmem_to_smem %s184, 128, [#allocation9], [#allocation8]
        $region24: #{tpu_custom_call.1} parent=11 // pred_fallthru
          _
        // Predicated region
        $region25: #{tpu_custom_call.1} parent=11 // pred_check
          %p187 = pneg %p129
        $region26: #{tpu_custom_call.1} parent=11 // pred_check_branch
          %189 = sbr.rel (%p187) target = $region28
        $region27: #{tpu_custom_call.1} parent=11 // pred_region
          _
        $region28: #{tpu_custom_call.1} parent=11 // pred_fallthru
          _
      $region12: #{tpu_custom_call.1} parent=5 // pred_fallthru
        _
      %p190 = scmp.lt.s32.totalorder %s19, 2
      // Predicated region
      $region29: #{tpu_custom_call.1} parent=5 // pred_check
        %p191 = pneg %p190
      $region30: #{tpu_custom_call.1} parent=5 // pred_check_branch
        %193 = sbr.rel (%p191) target = $region32
      $region31: #{tpu_custom_call.1} parent=5 // pred_region
        // Predicated region
        $region33: #{tpu_custom_call.1} parent=31 // pred_check
          %p194 = pneg %p39
        $region34: #{tpu_custom_call.1} parent=31 // pred_check_branch
          %196 = sbr.rel (%p194) target = $region36
        $region35: #{tpu_custom_call.1} parent=31 // pred_region
          %s197 = sand.u32 %s29, 1
          %s198 = scalar_lea.sflag [#allocation6], %s197
          %s199 = sand.u32 %s29, 1
          %s200 = smul.addr %s199, 64
          %s201 = scalar_lea.vmem [#allocation5], %s200
          %s203 = ssub.s32 1024, 1024
          %204 = vsyncadd %s198, %s203
          %s205 = smul.addr %s19, 8
          %s206 = smul.addr %s205, 128
          %s207 = scalar_lea.hbm %s0, %s206
          %s208 = sshll.u32 %s201, 4
          %s209 = int_to_ptr.vmem [resolvable:$true] %s208
          %214 = dma.hbm_to_vmem [thread:$0]  %s207, 1024, %s209, %s198, 256, 256, 16
        $region36: #{tpu_custom_call.1} parent=31 // pred_fallthru
          _
      $region32: #{tpu_custom_call.1} parent=5 // pred_fallthru
        _
      %p215 = scmp.le.s32.totalorder 1, %s19
      %p216 = scmp.lt.s32.totalorder %s19, 3
      %p217 = pnand %p215, %p216
      %p218 = pneg %p217
      // Predicated region
      $region37: #{tpu_custom_call.1} parent=5 // pred_check
        _
      $region38: #{tpu_custom_call.1} parent=5 // pred_check_branch
        %220 = sbr.rel (%p217) target = $region40
      $region39: #{tpu_custom_call.1} parent=5 // pred_region
        %s221 = ssub.s32 %s19, 1
        %s222 = sand.u32 %s32, 1
        %s223 = scalar_lea.sflag [#allocation6], %s222
        %s224 = sand.u32 %s32, 1
        %s225 = smul.addr %s224, 64
        %s226 = scalar_lea.vmem [#allocation5], %s225
        // Predicated region
        $region41: #{tpu_custom_call.1} parent=39 // pred_check
          %p227 = pneg %p45
        $region42: #{tpu_custom_call.1} parent=39 // pred_check_branch
          %229 = sbr.rel (%p227) target = $region44
        $region43: #{tpu_custom_call.1} parent=39 // pred_region
          %230 = dma.done %s223, 1024
        $region44: #{tpu_custom_call.1} parent=39 // pred_fallthru
          _
        // Predicated region
        $region45: #{tpu_custom_call.1} parent=39 // pred_check
          %p231 = pneg %p108
        $region46: #{tpu_custom_call.1} parent=39 // pred_check_branch
          %233 = sbr.rel (%p231) target = $region48
        $region47: #{tpu_custom_call.1} parent=39 // pred_region
          %234 = dma.done [#allocation8], 128
        $region48: #{tpu_custom_call.1} parent=39 // pred_fallthru
          _
        %235 = sfence
        %s236 = sand.u32 %s32, 1
        %s237 = scalar_lea.sflag [#allocation6], %s236
        %s238 = sand.u32 %s32, 1
        %s239 = smul.addr %s238, 64
        %s240 = scalar_lea.vmem [#allocation5], %s239
        %p241 = pneg %p45
        %p242 = pneg %p42
        %p243 = pneg %p66
        %p244 = pneg %p63
        %p245 = pneg %p87
        %p246 = pneg %p84
        %p247 = pneg %p108
        %p248 = pneg %p105
        %p249 = pneg %p129
        %p250 = pneg %p126
        %p251 = pneg %p155
        %p252 = pneg %p152
        %s253 = sand.u32 %s142, 1
        %s254 = scalar_lea.sflag [#allocation7], %s253
        %s255 = sand.u32 %s142, 1
        %s256 = smul.addr %s255, 64
        %s257 = scalar_lea.vmem [#allocation10], %s256
        %258 = vst [vmem:[#allocation2] sm:$0xff] 0.0
        %259 = vst [vmem:[#allocation2 + $0x8] sm:$0xff] 0.0
        %260 = vst [vmem:[#allocation2 + $0x10] sm:$0xff] 0.0
        %v261 = vld [vmem:[%s1] sm:$0xff]
        %v262 = vld [vmem:[%s1 + $0x8] sm:$0xff]
        %v263 = vld [vmem:[%s1 + $0x10] sm:$0xff]
        %v264 = vld [vmem:[%s1 + $0x18] sm:$0xff]
        %v265 = vld [vmem:[%s2] sm:$0xff]
        %v266 = vld [vmem:[%s2 + $0x8] sm:$0xff]
        %v267 = vld [vmem:[%s2 + $0x10] sm:$0xff]
        %v268 = vld [vmem:[%s2 + $0x18] sm:$0xff]
        %s269 = sld [smem:[#allocation4]]
        %v270 = vld [vmem:[%s226] sm:$0xff]
        %v271 = vld [vmem:[%s226 + $0x8] sm:$0xff]
        %v272 = vld [vmem:[%s226 + $0x10] sm:$0xff]
        %v273 = vld [vmem:[%s226 + $0x18] sm:$0xff]
        %v274 = vld [vmem:[%s226 + $0x20] sm:$0xff]
        %v275 = vld [vmem:[%s226 + $0x28] sm:$0xff]
        %v276 = vld [vmem:[%s226 + $0x30] sm:$0xff]
        %v277 = vld [vmem:[%s226 + $0x38] sm:$0xff]
        %v278 = vadd.f32 %v270, %v271
        %279 = vadd.xlane.f32.xlu0 %v278
        %v280 = vpop.xlane.xlu0 %279
        %v281 = vadd.f32 %v272, %v273
        %282 = vadd.xlane.f32.xlu0 %v281
        %v283 = vpop.xlane.xlu0 %282
        %v284 = vadd.f32 %v274, %v275
        %285 = vadd.xlane.f32.xlu0 %v284
        %v286 = vpop.xlane.xlu0 %285
        %v287 = vadd.f32 %v276, %v277
        %288 = vadd.xlane.f32.xlu0 %v287
        %v289 = vpop.xlane.xlu0 %288
        %v290 = vmul.f32 %v280, 0.001953125
        %v291 = vmul.f32 %v283, 0.001953125
        %v292 = vmul.f32 %v286, 0.001953125
        %v293 = vmul.f32 %v289, 0.001953125
        %v294 = vmax.f32 %v270, %v271
        %295 = vmax.xlane.f32.xlu0 %v294
        %v296 = vpop.xlane.xlu0 %295
        %v297 = vmax.f32 %v272, %v273
        %298 = vmax.xlane.f32.xlu0 %v297
        %v299 = vpop.xlane.xlu0 %298
        %v300 = vmax.f32 %v274, %v275
        %301 = vmax.xlane.f32.xlu0 %v300
        %v302 = vpop.xlane.xlu0 %301
        %v303 = vmax.f32 %v276, %v277
        %304 = vmax.xlane.f32.xlu0 %v303
        %v305 = vpop.xlane.xlu0 %304
        %v306 = vmul.f32 %v296, 0.5
        %v307 = vmul.f32 %v299, 0.5
        %v308 = vmul.f32 %v302, 0.5
        %v309 = vmul.f32 %v305, 0.5
        %v310 = vadd.f32 %v290, %v306
        %v311 = vadd.f32 %v291, %v307
        %v312 = vadd.f32 %v292, %v308
        %v313 = vadd.f32 %v293, %v309
        %v314 = vmul.f32 %v261, %v310
        %v315 = vmul.f32 %v262, %v311
        %v316 = vmul.f32 %v263, %v312
        %v317 = vmul.f32 %v264, %v313
        %vm318 = vcmask 15360
        %v319 = vsel %vm318, %v314, 0.0
        %v320 = vsel %vm318, %v315, 0.0
        %v321 = vadd.f32 %v319, %v320
        %v322 = vsel %vm318, %v316, 0.0
        %v323 = vadd.f32 %v321, %v322
        %v324 = vsel %vm318, %v317, 0.0
        %v325 = vadd.f32 %v323, %v324
        %v326 = vrot.slane %v325, 4
        %v327 = vadd.f32 %v325, %v326
        %v328 = vrot.slane %v327, 2
        %v329 = vadd.f32 %v327, %v328
        %v330 = vrot.slane %v329, 1
        %v331 = vadd.f32 %v329, %v330
        %v332 = vmax.f32 %v331, 0.0
        %v333 = vmul.f32 %v265, %v332
        %v334 = vmul.f32 %v266, %v332
        %v335 = vmul.f32 %v267, %v332
        %v336 = vmul.f32 %v268, %v332
        %v337 = vsel %vm318, %v333, 0.0
        %338 = vadd.xlane.f32.xlu0 %v337
        %v339 = vpop.xlane.xlu0 %338
        %v340 = vsel %vm318, %v334, 0.0
        %341 = vadd.xlane.f32.xlu0 %v340
        %v342 = vpop.xlane.xlu0 %341
        %v343 = vsel %vm318, %v335, 0.0
        %344 = vadd.xlane.f32.xlu0 %v343
        %v345 = vpop.xlane.xlu0 %344
        %v346 = vsel %vm318, %v336, 0.0
        %347 = vadd.xlane.f32.xlu0 %v346
        %v348 = vpop.xlane.xlu0 %347
        %v349 = vxor.u32 %v339, 2147483648
        %v350 = vxor.u32 %v342, 2147483648
        %v351 = vxor.u32 %v345, 2147483648
        %v352 = vxor.u32 %v348, 2147483648
        %v353 = vmul.f32 %v349, 1.442695
        %v354 = vpow.pop %v353
        %v355 = vmul.f32 %v350, 1.442695
        %v356 = vpow.pop %v355
        %v357 = vmul.f32 %v351, 1.442695
        %v358 = vpow.pop %v357
        %v359 = vmul.f32 %v352, 1.442695
        %v360 = vpow.pop %v359
        %v361 = vadd.f32 %v354, 1.0
        %v362 = vadd.f32 %v356, 1.0
        %v363 = vadd.f32 %v358, 1.0
        %v364 = vadd.f32 %v360, 1.0
        %v365 = vrcp.pop %v361
        %v366 = vmul.f32 1.0, %v365
        %v367 = vrcp.pop %v362
        %v368 = vmul.f32 1.0, %v367
        %v369 = vrcp.pop %v363
        %v370 = vmul.f32 1.0, %v369
        %v371 = vrcp.pop %v364
        %v372 = vmul.f32 1.0, %v371
        %v373 = vmul.f32 %v270, %v366
        %v374 = vmul.f32 %v271, %v366
        %v375 = vmul.f32 %v272, %v368
        %v376 = vmul.f32 %v273, %v368
        %v377 = vmul.f32 %v274, %v370
        %v378 = vmul.f32 %v275, %v370
        %v379 = vmul.f32 %v276, %v372
        %v380 = vmul.f32 %v277, %v372
        %v381 = vadd.f32 %v373, %v375
        %v382 = vadd.f32 %v381, %v377
        %v383 = vadd.f32 %v382, %v379
        %v384 = vrot.slane %v383, 4
        %v385 = vadd.f32 %v383, %v384
        %v386 = vrot.slane %v385, 2
        %v387 = vadd.f32 %v385, %v386
        %v388 = vrot.slane %v387, 1
        %v389 = vadd.f32 %v387, %v388
        %v390 = vadd.f32 %v374, %v376
        %v391 = vadd.f32 %v390, %v378
        %v392 = vadd.f32 %v391, %v380
        %v393 = vrot.slane %v392, 4
        %v394 = vadd.f32 %v392, %v393
        %v395 = vrot.slane %v394, 2
        %v396 = vadd.f32 %v394, %v395
        %v397 = vrot.slane %v396, 1
        %v398 = vadd.f32 %v396, %v397
        %v399 = vmul.f32 %v389, 0.015625
        %v400 = vmul.f32 %v398, 0.015625
        %v401 = vmax.f32 %v373, %v377
        %v402 = vmax.f32 %v375, %v379
        %v403 = vmax.f32 %v401, %v402
        %v404 = vrot.slane %v403, 4
        %v405 = vmax.f32 %v403, %v404
        %v406 = vrot.slane %v405, 2
        %v407 = vmax.f32 %v405, %v406
        %v408 = vrot.slane %v407, 1
        %v409 = vmax.f32 %v407, %v408
        %v410 = vmax.f32 %v374, %v378
        %v411 = vmax.f32 %v376, %v380
        %v412 = vmax.f32 %v410, %v411
        %v413 = vrot.slane %v412, 4
        %v414 = vmax.f32 %v412, %v413
        %v415 = vrot.slane %v414, 2
        %v416 = vmax.f32 %v414, %v415
        %v417 = vrot.slane %v416, 1
        %v418 = vmax.f32 %v416, %v417
        %v419 = vmul.f32 %v409, 0.5
        %v420 = vmul.f32 %v418, 0.5
        %v421 = vadd.f32 %v399, %v419
        %v422 = vadd.f32 %v400, %v420
        %424 = vrot.lane.b32.xlu0 %v421, 3
        %v425 = vpop.permute.xlu0 %424
        %vm427 = vcmask 147480
        %428 = vst.msk [vmem:[#allocation2 + $0x3] sm:$0x1] %vm427, %v425
        %429 = vrot.lane.b32.xlu0 %v421, 115
        %v430 = vpop.permute.xlu0 %429
        %432 = vst.msk [vmem:[#allocation2 + $0x4] sm:$0x1] %vm427, %v430
        %433 = vrot.lane.b32.xlu0 %v421, 99
        %v434 = vpop.permute.xlu0 %433
        %436 = vst.msk [vmem:[#allocation2 + $0x5] sm:$0x1] %vm427, %v434
        %437 = vrot.lane.b32.xlu0 %v421, 83
        %v438 = vpop.permute.xlu0 %437
        %440 = vst.msk [vmem:[#allocation2 + $0x6] sm:$0x1] %vm427, %v438
        %441 = vrot.lane.b32.xlu0 %v421, 67
        %v442 = vpop.permute.xlu0 %441
        %444 = vst.msk [vmem:[#allocation2 + $0x7] sm:$0x1] %vm427, %v442
        %445 = vrot.lane.b32.xlu0 %v421, 51
        %v446 = vpop.permute.xlu0 %445
        %448 = vst.msk [vmem:[#allocation2 + $0x8] sm:$0x1] %vm427, %v446
        %449 = vrot.lane.b32.xlu0 %v421, 35
        %v450 = vpop.permute.xlu0 %449
        %452 = vst.msk [vmem:[#allocation2 + $0x9] sm:$0x1] %vm427, %v450
        %453 = vrot.lane.b32.xlu0 %v421, 19
        %v454 = vpop.permute.xlu0 %453
        %456 = vst.msk [vmem:[#allocation2 + $0xa] sm:$0x1] %vm427, %v454
        %458 = vrot.lane.b32.xlu0 %v422, 3
        %v459 = vpop.permute.xlu0 %458
        %461 = vst.msk [vmem:[#allocation2 + $0xb] sm:$0x1] %vm427, %v459
        %462 = vrot.lane.b32.xlu0 %v422, 115
        %v463 = vpop.permute.xlu0 %462
        %465 = vst.msk [vmem:[#allocation2 + $0xc] sm:$0x1] %vm427, %v463
        %466 = vrot.lane.b32.xlu0 %v422, 99
        %v467 = vpop.permute.xlu0 %466
        %469 = vst.msk [vmem:[#allocation2 + $0xd] sm:$0x1] %vm427, %v467
        %470 = vrot.lane.b32.xlu0 %v422, 83
        %v471 = vpop.permute.xlu0 %470
        %473 = vst.msk [vmem:[#allocation2 + $0xe] sm:$0x1] %vm427, %v471
        %474 = vrot.lane.b32.xlu0 %v422, 67
        %v475 = vpop.permute.xlu0 %474
        %477 = vst.msk [vmem:[#allocation2 + $0xf] sm:$0x1] %vm427, %v475
        %478 = vrot.lane.b32.xlu0 %v422, 51
        %v479 = vpop.permute.xlu0 %478
        %481 = vst.msk [vmem:[#allocation2 + $0x10] sm:$0x1] %vm427, %v479
        %482 = vrot.lane.b32.xlu0 %v422, 35
        %v483 = vpop.permute.xlu0 %482
        %485 = vst.msk [vmem:[#allocation2 + $0x11] sm:$0x1] %vm427, %v483
        %486 = vrot.lane.b32.xlu0 %v422, 19
        %v487 = vpop.permute.xlu0 %486
        %489 = vst.msk [vmem:[#allocation2 + $0x12] sm:$0x1] %vm427, %v487
        %v490 = vld [vmem:[#allocation2] sm:$0xff]
        %v491 = vld [vmem:[#allocation2 + $0x8] sm:$0xff]
        %v492 = vld [vmem:[#allocation2 + $0x10] sm:$0xff]
        %v493 = vstv %s269
        %s494 = sld [smem:[#allocation9]]
        %v495 = vstv %s494
        %v496 = vmul.f32 %v495, %v490
        %v497 = vmul.f32 %v495, %v491
        %v498 = vadd.f32 %v493, %v496
        %v499 = vadd.f32 %v493, %v497
        %s500 = sld [smem:[#allocation9 + $0x80]]
        %v501 = vstv %s500
        %v502 = vmul.f32 %v501, %v490
        %v503 = vmul.f32 %v501, %v491
        %v504 = vmul.f32 %v501, %v492
        %vm508 = vcmask 1046528
        %v509 = vrot.slane %v502, 1
        %v510 = vrot.slane %v503, 1
        %v511 = vsel %vm508, %v509, %v510
        %v512 = vrot.slane %v504, 1
        %v513 = vsel %vm508, %v510, %v512
        %v516 = vadd.f32 %v498, %v511
        %v517 = vadd.f32 %v499, %v513
        %s518 = sld [smem:[#allocation9 + $0x100]]
        %v519 = vstv %s518
        %v520 = vmul.f32 %v519, %v490
        %v521 = vmul.f32 %v519, %v491
        %v522 = vmul.f32 %v519, %v492
        %vm526 = vcmask 1045504
        %v527 = vrot.slane %v520, 2
        %v528 = vrot.slane %v521, 2
        %v529 = vsel %vm526, %v527, %v528
        %v530 = vrot.slane %v522, 2
        %v531 = vsel %vm526, %v528, %v530
        %v534 = vadd.f32 %v516, %v529
        %v535 = vadd.f32 %v517, %v531
        %s536 = sld [smem:[#allocation9 + $0x180]]
        %v537 = vstv %s536
        %v538 = vmul.f32 %v537, %v490
        %v539 = vmul.f32 %v537, %v491
        %v540 = vmul.f32 %v537, %v492
        %vm544 = vcmask 1044480
        %v545 = vrot.slane %v538, 3
        %v546 = vrot.slane %v539, 3
        %v547 = vsel %vm544, %v545, %v546
        %v548 = vrot.slane %v540, 3
        %v549 = vsel %vm544, %v546, %v548
        %v552 = vadd.f32 %v534, %v547
        %v553 = vadd.f32 %v535, %v549
        %s554 = sld [smem:[#allocation9 + $0x200]]
        %v555 = vstv %s554
        %v556 = vmul.f32 %v555, %v490
        %v557 = vmul.f32 %v555, %v491
        %v558 = vmul.f32 %v555, %v492
        %vm562 = vcmask 1043456
        %v563 = vrot.slane %v556, 4
        %v564 = vrot.slane %v557, 4
        %v565 = vsel %vm562, %v563, %v564
        %v566 = vrot.slane %v558, 4
        %v567 = vsel %vm562, %v564, %v566
        %v570 = vadd.f32 %v552, %v565
        %v571 = vadd.f32 %v553, %v567
        %s572 = sld [smem:[#allocation9 + $0x280]]
        %v573 = vstv %s572
        %v574 = vmul.f32 %v573, %v490
        %v575 = vmul.f32 %v573, %v491
        %v576 = vmul.f32 %v573, %v492
        %vm580 = vcmask 1042432
        %v581 = vrot.slane %v574, 5
        %v582 = vrot.slane %v575, 5
        %v583 = vsel %vm580, %v581, %v582
        %v584 = vrot.slane %v576, 5
        %v585 = vsel %vm580, %v582, %v584
        %v588 = vadd.f32 %v570, %v583
        %v589 = vadd.f32 %v571, %v585
        %s590 = sld [smem:[#allocation9 + $0x300]]
        %v591 = vstv %s590
        %v592 = vmul.f32 %v591, %v490
        %v593 = vmul.f32 %v591, %v491
        %v594 = vmul.f32 %v591, %v492
        %vm598 = vcmask 1041408
        %v599 = vrot.slane %v592, 6
        %v600 = vrot.slane %v593, 6
        %v601 = vsel %vm598, %v599, %v600
        %v602 = vrot.slane %v594, 6
        %v603 = vsel %vm598, %v600, %v602
        %v606 = vadd.f32 %v588, %v601
        %v607 = vadd.f32 %v589, %v603
        %608 = vrot.lane.b32.xlu0 %v490, 127
        %v609 = vpop.permute.xlu0 %608
        %610 = vrot.lane.b32.xlu0 %v491, 127
        %v611 = vpop.permute.xlu0 %610
        %612 = vrot.lane.b32.xlu0 %v492, 127
        %v613 = vpop.permute.xlu0 %612
        %s614 = sld [smem:[#allocation9 + $0x1]]
        %v615 = vstv %s614
        %v616 = vmul.f32 %v615, %v609
        %v617 = vmul.f32 %v615, %v611
        %v618 = vadd.f32 %v606, %v616
        %v619 = vadd.f32 %v607, %v617
        %s620 = sld [smem:[#allocation9 + $0x81]]
        %v621 = vstv %s620
        %v622 = vmul.f32 %v621, %v609
        %v623 = vmul.f32 %v621, %v611
        %v624 = vmul.f32 %v621, %v613
        %v628 = vrot.slane %v622, 1
        %v629 = vrot.slane %v623, 1
        %v630 = vsel %vm508, %v628, %v629
        %v631 = vrot.slane %v624, 1
        %v632 = vsel %vm508, %v629, %v631
        %v635 = vadd.f32 %v618, %v630
        %v636 = vadd.f32 %v619, %v632
        %s637 = sld [smem:[#allocation9 + $0x101]]
        %v638 = vstv %s637
        %v639 = vmul.f32 %v638, %v609
        %v640 = vmul.f32 %v638, %v611
        %v641 = vmul.f32 %v638, %v613
        %v645 = vrot.slane %v639, 2
        %v646 = vrot.slane %v640, 2
        %v647 = vsel %vm526, %v645, %v646
        %v648 = vrot.slane %v641, 2
        %v649 = vsel %vm526, %v646, %v648
        %v652 = vadd.f32 %v635, %v647
        %v653 = vadd.f32 %v636, %v649
        %s654 = sld [smem:[#allocation9 + $0x181]]
        %v655 = vstv %s654
        %v656 = vmul.f32 %v655, %v609
        %v657 = vmul.f32 %v655, %v611
        %v658 = vmul.f32 %v655, %v613
        %v662 = vrot.slane %v656, 3
        %v663 = vrot.slane %v657, 3
        %v664 = vsel %vm544, %v662, %v663
        %v665 = vrot.slane %v658, 3
        %v666 = vsel %vm544, %v663, %v665
        %v669 = vadd.f32 %v652, %v664
        %v670 = vadd.f32 %v653, %v666
        %s671 = sld [smem:[#allocation9 + $0x201]]
        %v672 = vstv %s671
        %v673 = vmul.f32 %v672, %v609
        %v674 = vmul.f32 %v672, %v611
        %v675 = vmul.f32 %v672, %v613
        %v679 = vrot.slane %v673, 4
        %v680 = vrot.slane %v674, 4
        %v681 = vsel %vm562, %v679, %v680
        %v682 = vrot.slane %v675, 4
        %v683 = vsel %vm562, %v680, %v682
        %v686 = vadd.f32 %v669, %v681
        %v687 = vadd.f32 %v670, %v683
        %s688 = sld [smem:[#allocation9 + $0x281]]
        %v689 = vstv %s688
        %v690 = vmul.f32 %v689, %v609
        %v691 = vmul.f32 %v689, %v611
        %v692 = vmul.f32 %v689, %v613
        %v696 = vrot.slane %v690, 5
        %v697 = vrot.slane %v691, 5
        %v698 = vsel %vm580, %v696, %v697
        %v699 = vrot.slane %v692, 5
        %v700 = vsel %vm580, %v697, %v699
        %v703 = vadd.f32 %v686, %v698
        %v704 = vadd.f32 %v687, %v700
        %s705 = sld [smem:[#allocation9 + $0x301]]
        %v706 = vstv %s705
        %v707 = vmul.f32 %v706, %v609
        %v708 = vmul.f32 %v706, %v611
        %v709 = vmul.f32 %v706, %v613
        %v713 = vrot.slane %v707, 6
        %v714 = vrot.slane %v708, 6
        %v715 = vsel %vm598, %v713, %v714
        %v716 = vrot.slane %v709, 6
        %v717 = vsel %vm598, %v714, %v716
        %v720 = vadd.f32 %v703, %v715
        %v721 = vadd.f32 %v704, %v717
        %722 = vrot.lane.b32.xlu0 %v490, 126
        %v723 = vpop.permute.xlu0 %722
        %724 = vrot.lane.b32.xlu0 %v491, 126
        %v725 = vpop.permute.xlu0 %724
        %726 = vrot.lane.b32.xlu0 %v492, 126
        %v727 = vpop.permute.xlu0 %726
        %s728 = sld [smem:[#allocation9 + $0x2]]
        %v729 = vstv %s728
        %v730 = vmul.f32 %v729, %v723
        %v731 = vmul.f32 %v729, %v725
        %v732 = vadd.f32 %v720, %v730
        %v733 = vadd.f32 %v721, %v731
        %s734 = sld [smem:[#allocation9 + $0x82]]
        %v735 = vstv %s734
        %v736 = vmul.f32 %v735, %v723
        %v737 = vmul.f32 %v735, %v725
        %v738 = vmul.f32 %v735, %v727
        %v742 = vrot.slane %v736, 1
        %v743 = vrot.slane %v737, 1
        %v744 = vsel %vm508, %v742, %v743
        %v745 = vrot.slane %v738, 1
        %v746 = vsel %vm508, %v743, %v745
        %v749 = vadd.f32 %v732, %v744
        %v750 = vadd.f32 %v733, %v746
        %s751 = sld [smem:[#allocation9 + $0x102]]
        %v752 = vstv %s751
        %v753 = vmul.f32 %v752, %v723
        %v754 = vmul.f32 %v752, %v725
        %v755 = vmul.f32 %v752, %v727
        %v759 = vrot.slane %v753, 2
        %v760 = vrot.slane %v754, 2
        %v761 = vsel %vm526, %v759, %v760
        %v762 = vrot.slane %v755, 2
        %v763 = vsel %vm526, %v760, %v762
        %v766 = vadd.f32 %v749, %v761
        %v767 = vadd.f32 %v750, %v763
        %s768 = sld [smem:[#allocation9 + $0x182]]
        %v769 = vstv %s768
        %v770 = vmul.f32 %v769, %v723
        %v771 = vmul.f32 %v769, %v725
        %v772 = vmul.f32 %v769, %v727
        %v776 = vrot.slane %v770, 3
        %v777 = vrot.slane %v771, 3
        %v778 = vsel %vm544, %v776, %v777
        %v779 = vrot.slane %v772, 3
        %v780 = vsel %vm544, %v777, %v779
        %v783 = vadd.f32 %v766, %v778
        %v784 = vadd.f32 %v767, %v780
        %s785 = sld [smem:[#allocation9 + $0x202]]
        %v786 = vstv %s785
        %v787 = vmul.f32 %v786, %v723
        %v788 = vmul.f32 %v786, %v725
        %v789 = vmul.f32 %v786, %v727
        %v793 = vrot.slane %v787, 4
        %v794 = vrot.slane %v788, 4
        %v795 = vsel %vm562, %v793, %v794
        %v796 = vrot.slane %v789, 4
        %v797 = vsel %vm562, %v794, %v796
        %v800 = vadd.f32 %v783, %v795
        %v801 = vadd.f32 %v784, %v797
        %s802 = sld [smem:[#allocation9 + $0x282]]
        %v803 = vstv %s802
        %v804 = vmul.f32 %v803, %v723
        %v805 = vmul.f32 %v803, %v725
        %v806 = vmul.f32 %v803, %v727
        %v810 = vrot.slane %v804, 5
        %v811 = vrot.slane %v805, 5
        %v812 = vsel %vm580, %v810, %v811
        %v813 = vrot.slane %v806, 5
        %v814 = vsel %vm580, %v811, %v813
        %v817 = vadd.f32 %v800, %v812
        %v818 = vadd.f32 %v801, %v814
        %s819 = sld [smem:[#allocation9 + $0x302]]
        %v820 = vstv %s819
        %v821 = vmul.f32 %v820, %v723
        %v822 = vmul.f32 %v820, %v725
        %v823 = vmul.f32 %v820, %v727
        %v827 = vrot.slane %v821, 6
        %v828 = vrot.slane %v822, 6
        %v829 = vsel %vm598, %v827, %v828
        %v830 = vrot.slane %v823, 6
        %v831 = vsel %vm598, %v828, %v830
        %v834 = vadd.f32 %v817, %v829
        %v835 = vadd.f32 %v818, %v831
        %836 = vrot.lane.b32.xlu0 %v490, 125
        %v837 = vpop.permute.xlu0 %836
        %838 = vrot.lane.b32.xlu0 %v491, 125
        %v839 = vpop.permute.xlu0 %838
        %840 = vrot.lane.b32.xlu0 %v492, 125
        %v841 = vpop.permute.xlu0 %840
        %s842 = sld [smem:[#allocation9 + $0x3]]
        %v843 = vstv %s842
        %v844 = vmul.f32 %v843, %v837
        %v845 = vmul.f32 %v843, %v839
        %v846 = vadd.f32 %v834, %v844
        %v847 = vadd.f32 %v835, %v845
        %s848 = sld [smem:[#allocation9 + $0x83]]
        %v849 = vstv %s848
        %v850 = vmul.f32 %v849, %v837
        %v851 = vmul.f32 %v849, %v839
        %v852 = vmul.f32 %v849, %v841
        %v856 = vrot.slane %v850, 1
        %v857 = vrot.slane %v851, 1
        %v858 = vsel %vm508, %v856, %v857
        %v859 = vrot.slane %v852, 1
        %v860 = vsel %vm508, %v857, %v859
        %v863 = vadd.f32 %v846, %v858
        %v864 = vadd.f32 %v847, %v860
        %s865 = sld [smem:[#allocation9 + $0x103]]
        %v866 = vstv %s865
        %v867 = vmul.f32 %v866, %v837
        %v868 = vmul.f32 %v866, %v839
        %v869 = vmul.f32 %v866, %v841
        %v873 = vrot.slane %v867, 2
        %v874 = vrot.slane %v868, 2
        %v875 = vsel %vm526, %v873, %v874
        %v876 = vrot.slane %v869, 2
        %v877 = vsel %vm526, %v874, %v876
        %v880 = vadd.f32 %v863, %v875
        %v881 = vadd.f32 %v864, %v877
        %s882 = sld [smem:[#allocation9 + $0x183]]
        %v883 = vstv %s882
        %v884 = vmul.f32 %v883, %v837
        %v885 = vmul.f32 %v883, %v839
        %v886 = vmul.f32 %v883, %v841
        %v890 = vrot.slane %v884, 3
        %v891 = vrot.slane %v885, 3
        %v892 = vsel %vm544, %v890, %v891
        %v893 = vrot.slane %v886, 3
        %v894 = vsel %vm544, %v891, %v893
        %v897 = vadd.f32 %v880, %v892
        %v898 = vadd.f32 %v881, %v894
        %s899 = sld [smem:[#allocation9 + $0x203]]
        %v900 = vstv %s899
        %v901 = vmul.f32 %v900, %v837
        %v902 = vmul.f32 %v900, %v839
        %v903 = vmul.f32 %v900, %v841
        %v907 = vrot.slane %v901, 4
        %v908 = vrot.slane %v902, 4
        %v909 = vsel %vm562, %v907, %v908
        %v910 = vrot.slane %v903, 4
        %v911 = vsel %vm562, %v908, %v910
        %v914 = vadd.f32 %v897, %v909
        %v915 = vadd.f32 %v898, %v911
        %s916 = sld [smem:[#allocation9 + $0x283]]
        %v917 = vstv %s916
        %v918 = vmul.f32 %v917, %v837
        %v919 = vmul.f32 %v917, %v839
        %v920 = vmul.f32 %v917, %v841
        %v924 = vrot.slane %v918, 5
        %v925 = vrot.slane %v919, 5
        %v926 = vsel %vm580, %v924, %v925
        %v927 = vrot.slane %v920, 5
        %v928 = vsel %vm580, %v925, %v927
        %v931 = vadd.f32 %v914, %v926
        %v932 = vadd.f32 %v915, %v928
        %s933 = sld [smem:[#allocation9 + $0x303]]
        %v934 = vstv %s933
        %v935 = vmul.f32 %v934, %v837
        %v936 = vmul.f32 %v934, %v839
        %v937 = vmul.f32 %v934, %v841
        %v941 = vrot.slane %v935, 6
        %v942 = vrot.slane %v936, 6
        %v943 = vsel %vm598, %v941, %v942
        %v944 = vrot.slane %v937, 6
        %v945 = vsel %vm598, %v942, %v944
        %v948 = vadd.f32 %v931, %v943
        %v949 = vadd.f32 %v932, %v945
        %950 = vrot.lane.b32.xlu0 %v490, 124
        %v951 = vpop.permute.xlu0 %950
        %952 = vrot.lane.b32.xlu0 %v491, 124
        %v953 = vpop.permute.xlu0 %952
        %954 = vrot.lane.b32.xlu0 %v492, 124
        %v955 = vpop.permute.xlu0 %954
        %s956 = sld [smem:[#allocation9 + $0x4]]
        %v957 = vstv %s956
        %v958 = vmul.f32 %v957, %v951
        %v959 = vmul.f32 %v957, %v953
        %v960 = vadd.f32 %v948, %v958
        %v961 = vadd.f32 %v949, %v959
        %s962 = sld [smem:[#allocation9 + $0x84]]
        %v963 = vstv %s962
        %v964 = vmul.f32 %v963, %v951
        %v965 = vmul.f32 %v963, %v953
        %v966 = vmul.f32 %v963, %v955
        %v970 = vrot.slane %v964, 1
        %v971 = vrot.slane %v965, 1
        %v972 = vsel %vm508, %v970, %v971
        %v973 = vrot.slane %v966, 1
        %v974 = vsel %vm508, %v971, %v973
        %v977 = vadd.f32 %v960, %v972
        %v978 = vadd.f32 %v961, %v974
        %s979 = sld [smem:[#allocation9 + $0x104]]
        %v980 = vstv %s979
        %v981 = vmul.f32 %v980, %v951
        %v982 = vmul.f32 %v980, %v953
        %v983 = vmul.f32 %v980, %v955
        %v987 = vrot.slane %v981, 2
        %v988 = vrot.slane %v982, 2
        %v989 = vsel %vm526, %v987, %v988
        %v990 = vrot.slane %v983, 2
        %v991 = vsel %vm526, %v988, %v990
        %v994 = vadd.f32 %v977, %v989
        %v995 = vadd.f32 %v978, %v991
        %s996 = sld [smem:[#allocation9 + $0x184]]
        %v997 = vstv %s996
        %v998 = vmul.f32 %v997, %v951
        %v999 = vmul.f32 %v997, %v953
        %v1000 = vmul.f32 %v997, %v955
        %v1004 = vrot.slane %v998, 3
        %v1005 = vrot.slane %v999, 3
        %v1006 = vsel %vm544, %v1004, %v1005
        %v1007 = vrot.slane %v1000, 3
        %v1008 = vsel %vm544, %v1005, %v1007
        %v1011 = vadd.f32 %v994, %v1006
        %v1012 = vadd.f32 %v995, %v1008
        %s1013 = sld [smem:[#allocation9 + $0x204]]
        %v1014 = vstv %s1013
        %v1015 = vmul.f32 %v1014, %v951
        %v1016 = vmul.f32 %v1014, %v953
        %v1017 = vmul.f32 %v1014, %v955
        %v1021 = vrot.slane %v1015, 4
        %v1022 = vrot.slane %v1016, 4
        %v1023 = vsel %vm562, %v1021, %v1022
        %v1024 = vrot.slane %v1017, 4
        %v1025 = vsel %vm562, %v1022, %v1024
        %v1028 = vadd.f32 %v1011, %v1023
        %v1029 = vadd.f32 %v1012, %v1025
        %s1030 = sld [smem:[#allocation9 + $0x284]]
        %v1031 = vstv %s1030
        %v1032 = vmul.f32 %v1031, %v951
        %v1033 = vmul.f32 %v1031, %v953
        %v1034 = vmul.f32 %v1031, %v955
        %v1038 = vrot.slane %v1032, 5
        %v1039 = vrot.slane %v1033, 5
        %v1040 = vsel %vm580, %v1038, %v1039
        %v1041 = vrot.slane %v1034, 5
        %v1042 = vsel %vm580, %v1039, %v1041
        %v1045 = vadd.f32 %v1028, %v1040
        %v1046 = vadd.f32 %v1029, %v1042
        %s1047 = sld [smem:[#allocation9 + $0x304]]
        %v1048 = vstv %s1047
        %v1049 = vmul.f32 %v1048, %v951
        %v1050 = vmul.f32 %v1048, %v953
        %v1051 = vmul.f32 %v1048, %v955
        %v1055 = vrot.slane %v1049, 6
        %v1056 = vrot.slane %v1050, 6
        %v1057 = vsel %vm598, %v1055, %v1056
        %v1058 = vrot.slane %v1051, 6
        %v1059 = vsel %vm598, %v1056, %v1058
        %v1062 = vadd.f32 %v1045, %v1057
        %v1063 = vadd.f32 %v1046, %v1059
        %1064 = vrot.lane.b32.xlu0 %v490, 123
        %v1065 = vpop.permute.xlu0 %1064
        %1066 = vrot.lane.b32.xlu0 %v491, 123
        %v1067 = vpop.permute.xlu0 %1066
        %1068 = vrot.lane.b32.xlu0 %v492, 123
        %v1069 = vpop.permute.xlu0 %1068
        %s1070 = sld [smem:[#allocation9 + $0x5]]
        %v1071 = vstv %s1070
        %v1072 = vmul.f32 %v1071, %v1065
        %v1073 = vmul.f32 %v1071, %v1067
        %v1074 = vadd.f32 %v1062, %v1072
        %v1075 = vadd.f32 %v1063, %v1073
        %s1076 = sld [smem:[#allocation9 + $0x85]]
        %v1077 = vstv %s1076
        %v1078 = vmul.f32 %v1077, %v1065
        %v1079 = vmul.f32 %v1077, %v1067
        %v1080 = vmul.f32 %v1077, %v1069
        %v1084 = vrot.slane %v1078, 1
        %v1085 = vrot.slane %v1079, 1
        %v1086 = vsel %vm508, %v1084, %v1085
        %v1087 = vrot.slane %v1080, 1
        %v1088 = vsel %vm508, %v1085, %v1087
        %v1091 = vadd.f32 %v1074, %v1086
        %v1092 = vadd.f32 %v1075, %v1088
        %s1093 = sld [smem:[#allocation9 + $0x105]]
        %v1094 = vstv %s1093
        %v1095 = vmul.f32 %v1094, %v1065
        %v1096 = vmul.f32 %v1094, %v1067
        %v1097 = vmul.f32 %v1094, %v1069
        %v1101 = vrot.slane %v1095, 2
        %v1102 = vrot.slane %v1096, 2
        %v1103 = vsel %vm526, %v1101, %v1102
        %v1104 = vrot.slane %v1097, 2
        %v1105 = vsel %vm526, %v1102, %v1104
        %v1108 = vadd.f32 %v1091, %v1103
        %v1109 = vadd.f32 %v1092, %v1105
        %s1110 = sld [smem:[#allocation9 + $0x185]]
        %v1111 = vstv %s1110
        %v1112 = vmul.f32 %v1111, %v1065
        %v1113 = vmul.f32 %v1111, %v1067
        %v1114 = vmul.f32 %v1111, %v1069
        %v1118 = vrot.slane %v1112, 3
        %v1119 = vrot.slane %v1113, 3
        %v1120 = vsel %vm544, %v1118, %v1119
        %v1121 = vrot.slane %v1114, 3
        %v1122 = vsel %vm544, %v1119, %v1121
        %v1125 = vadd.f32 %v1108, %v1120
        %v1126 = vadd.f32 %v1109, %v1122
        %s1127 = sld [smem:[#allocation9 + $0x205]]
        %v1128 = vstv %s1127
        %v1129 = vmul.f32 %v1128, %v1065
        %v1130 = vmul.f32 %v1128, %v1067
        %v1131 = vmul.f32 %v1128, %v1069
        %v1135 = vrot.slane %v1129, 4
        %v1136 = vrot.slane %v1130, 4
        %v1137 = vsel %vm562, %v1135, %v1136
        %v1138 = vrot.slane %v1131, 4
        %v1139 = vsel %vm562, %v1136, %v1138
        %v1142 = vadd.f32 %v1125, %v1137
        %v1143 = vadd.f32 %v1126, %v1139
        %s1144 = sld [smem:[#allocation9 + $0x285]]
        %v1145 = vstv %s1144
        %v1146 = vmul.f32 %v1145, %v1065
        %v1147 = vmul.f32 %v1145, %v1067
        %v1148 = vmul.f32 %v1145, %v1069
        %v1152 = vrot.slane %v1146, 5
        %v1153 = vrot.slane %v1147, 5
        %v1154 = vsel %vm580, %v1152, %v1153
        %v1155 = vrot.slane %v1148, 5
        %v1156 = vsel %vm580, %v1153, %v1155
        %v1159 = vadd.f32 %v1142, %v1154
        %v1160 = vadd.f32 %v1143, %v1156
        %s1161 = sld [smem:[#allocation9 + $0x305]]
        %v1162 = vstv %s1161
        %v1163 = vmul.f32 %v1162, %v1065
        %v1164 = vmul.f32 %v1162, %v1067
        %v1165 = vmul.f32 %v1162, %v1069
        %v1169 = vrot.slane %v1163, 6
        %v1170 = vrot.slane %v1164, 6
        %v1171 = vsel %vm598, %v1169, %v1170
        %v1172 = vrot.slane %v1165, 6
        %v1173 = vsel %vm598, %v1170, %v1172
        %v1176 = vadd.f32 %v1159, %v1171
        %v1177 = vadd.f32 %v1160, %v1173
        %1178 = vrot.lane.b32.xlu0 %v490, 122
        %v1179 = vpop.permute.xlu0 %1178
        %1180 = vrot.lane.b32.xlu0 %v491, 122
        %v1181 = vpop.permute.xlu0 %1180
        %1182 = vrot.lane.b32.xlu0 %v492, 122
        %v1183 = vpop.permute.xlu0 %1182
        %s1184 = sld [smem:[#allocation9 + $0x6]]
        %v1185 = vstv %s1184
        %v1186 = vmul.f32 %v1185, %v1179
        %v1187 = vmul.f32 %v1185, %v1181
        %v1188 = vadd.f32 %v1176, %v1186
        %v1189 = vadd.f32 %v1177, %v1187
        %s1190 = sld [smem:[#allocation9 + $0x86]]
        %v1191 = vstv %s1190
        %v1192 = vmul.f32 %v1191, %v1179
        %v1193 = vmul.f32 %v1191, %v1181
        %v1194 = vmul.f32 %v1191, %v1183
        %v1198 = vrot.slane %v1192, 1
        %v1199 = vrot.slane %v1193, 1
        %v1200 = vsel %vm508, %v1198, %v1199
        %v1201 = vrot.slane %v1194, 1
        %v1202 = vsel %vm508, %v1199, %v1201
        %v1205 = vadd.f32 %v1188, %v1200
        %v1206 = vadd.f32 %v1189, %v1202
        %s1207 = sld [smem:[#allocation9 + $0x106]]
        %v1208 = vstv %s1207
        %v1209 = vmul.f32 %v1208, %v1179
        %v1210 = vmul.f32 %v1208, %v1181
        %v1211 = vmul.f32 %v1208, %v1183
        %v1215 = vrot.slane %v1209, 2
        %v1216 = vrot.slane %v1210, 2
        %v1217 = vsel %vm526, %v1215, %v1216
        %v1218 = vrot.slane %v1211, 2
        %v1219 = vsel %vm526, %v1216, %v1218
        %v1222 = vadd.f32 %v1205, %v1217
        %v1223 = vadd.f32 %v1206, %v1219
        %s1224 = sld [smem:[#allocation9 + $0x186]]
        %v1225 = vstv %s1224
        %v1226 = vmul.f32 %v1225, %v1179
        %v1227 = vmul.f32 %v1225, %v1181
        %v1228 = vmul.f32 %v1225, %v1183
        %v1232 = vrot.slane %v1226, 3
        %v1233 = vrot.slane %v1227, 3
        %v1234 = vsel %vm544, %v1232, %v1233
        %v1235 = vrot.slane %v1228, 3
        %v1236 = vsel %vm544, %v1233, %v1235
        %v1239 = vadd.f32 %v1222, %v1234
        %v1240 = vadd.f32 %v1223, %v1236
        %s1241 = sld [smem:[#allocation9 + $0x206]]
        %v1242 = vstv %s1241
        %v1243 = vmul.f32 %v1242, %v1179
        %v1244 = vmul.f32 %v1242, %v1181
        %v1245 = vmul.f32 %v1242, %v1183
        %v1249 = vrot.slane %v1243, 4
        %v1250 = vrot.slane %v1244, 4
        %v1251 = vsel %vm562, %v1249, %v1250
        %v1252 = vrot.slane %v1245, 4
        %v1253 = vsel %vm562, %v1250, %v1252
        %v1256 = vadd.f32 %v1239, %v1251
        %v1257 = vadd.f32 %v1240, %v1253
        %s1258 = sld [smem:[#allocation9 + $0x286]]
        %v1259 = vstv %s1258
        %v1260 = vmul.f32 %v1259, %v1179
        %v1261 = vmul.f32 %v1259, %v1181
        %v1262 = vmul.f32 %v1259, %v1183
        %v1266 = vrot.slane %v1260, 5
        %v1267 = vrot.slane %v1261, 5
        %v1268 = vsel %vm580, %v1266, %v1267
        %v1269 = vrot.slane %v1262, 5
        %v1270 = vsel %vm580, %v1267, %v1269
        %v1273 = vadd.f32 %v1256, %v1268
        %v1274 = vadd.f32 %v1257, %v1270
        %s1275 = sld [smem:[#allocation9 + $0x306]]
        %v1276 = vstv %s1275
        %v1277 = vmul.f32 %v1276, %v1179
        %v1278 = vmul.f32 %v1276, %v1181
        %v1279 = vmul.f32 %v1276, %v1183
        %v1283 = vrot.slane %v1277, 6
        %v1284 = vrot.slane %v1278, 6
        %v1285 = vsel %vm598, %v1283, %v1284
        %v1286 = vrot.slane %v1279, 6
        %v1287 = vsel %vm598, %v1284, %v1286
        %v1290 = vadd.f32 %v1273, %v1285
        %v1291 = vadd.f32 %v1274, %v1287
        %v1292 = vxor.u32 %v1290, 2147483648
        %v1293 = vxor.u32 %v1291, 2147483648
        %v1294 = vmul.f32 %v1292, 1.442695
        %v1295 = vpow.pop %v1294
        %v1296 = vmul.f32 %v1293, 1.442695
        %v1297 = vpow.pop %v1296
        %v1298 = vadd.f32 %v1295, 1.0
        %v1299 = vadd.f32 %v1297, 1.0
        %v1300 = vrcp.pop %v1298
        %v1301 = vmul.f32 1.0, %v1300
        %v1302 = vrcp.pop %v1299
        %v1303 = vmul.f32 1.0, %v1302
        %v1304 = vlaneseq
        %vm1305 = vcmp.ge.s32.totalorder %v1304, 0
        %vm1306 = vcmp.lt.s32.totalorder %v1304, 16
        %vm1307 = vmand %vm1305, %vm1306
        %1308 = vst.msk [vmem:[#allocation3] sm:$0x1] %vm1307, %v1301
        %v1311 = vunpack.c.l.s4 1966171168
        %v1312 = vunpack.c.0.s8 %v1311
        %v1313 = vlaneseq
        %v1314 = vshrl.u32 %v1313, 7
        %v1315 = vsub.s32 %v1312, %v1314
        %v1316 = vrot.slane %v1301, %v1315
        %v1317 = vcombine.high %v1316, %v1316
        %v1319 = vunpack.c.l.s4 1966171168
        %v1320 = vunpack.c.0.s8 %v1319
        %v1321 = vlaneseq
        %v1322 = vshrl.u32 %v1321, 7
        %v1323 = vsub.s32 %v1320, %v1322
        %v1324 = vrot.slane %v1316, %v1323
        %v1326 = vunpack.c.l.s4 1966171168
        %v1327 = vunpack.c.0.s8 %v1326
        %v1328 = vlaneseq
        %v1329 = vshrl.u32 %v1328, 7
        %v1330 = vsub.s32 %v1327, %v1329
        %v1331 = vrot.slane %v1317, %v1330
        %1332 = vrot.lane.b32.xlu0 %v1331, 16
        %v1333 = vpop.permute.xlu0 %1332
        %vm1335 = vcmp.ge.s32.totalorder %v1304, 16
        %vm1336 = vcmp.lt.s32.totalorder %v1304, 32
        %vm1337 = vmand %vm1335, %vm1336
        %1338 = vst.msk [vmem:[#allocation3] sm:$0x1] %vm1337, %v1333
        %v1339 = vcombine.high %v1324, %v1324
        %1340 = vrot.lane.b32.xlu0 %v1339, 32
        %v1341 = vpop.permute.xlu0 %1340
        %vm1343 = vcmp.ge.s32.totalorder %v1304, 32
        %vm1344 = vcmp.lt.s32.totalorder %v1304, 48
        %vm1345 = vmand %vm1343, %vm1344
        %1346 = vst.msk [vmem:[#allocation3] sm:$0x1] %vm1345, %v1341
        %v1347 = vcombine.high %v1331, %v1331
        %1348 = vrot.lane.b32.xlu0 %v1347, 48
        %v1349 = vpop.permute.xlu0 %1348
        %vm1351 = vcmp.ge.s32.totalorder %v1304, 48
        %vm1352 = vcmp.lt.s32.totalorder %v1304, 64
        %vm1353 = vmand %vm1351, %vm1352
        %1354 = vst.msk [vmem:[#allocation3] sm:$0x1] %vm1353, %v1349
        %v1355 = vcombine.high %v1301, %v1301
        %v1357 = vunpack.c.l.s4 1966171168
        %v1358 = vunpack.c.0.s8 %v1357
        %v1359 = vlaneseq
        %v1360 = vshrl.u32 %v1359, 7
        %v1361 = vsub.s32 %v1358, %v1360
        %v1362 = vrot.slane %v1355, %v1361
        %v1364 = vunpack.c.l.s4 1966171168
        %v1365 = vunpack.c.0.s8 %v1364
        %v1366 = vlaneseq
        %v1367 = vshrl.u32 %v1366, 7
        %v1368 = vsub.s32 %v1365, %v1367
        %v1369 = vrot.slane %v1362, %v1368
        %1370 = vrot.lane.b32.xlu0 %v1369, 64
        %v1371 = vpop.permute.xlu0 %1370
        %vm1373 = vcmp.ge.s32.totalorder %v1304, 64
        %vm1374 = vcmp.lt.s32.totalorder %v1304, 80
        %vm1375 = vmand %vm1373, %vm1374
        %1376 = vst.msk [vmem:[#allocation3] sm:$0x1] %vm1375, %v1371
        %v1377 = vcombine.high %v1362, %v1362
        %v1379 = vunpack.c.l.s4 1966171168
        %v1380 = vunpack.c.0.s8 %v1379
        %v1381 = vlaneseq
        %v1382 = vshrl.u32 %v1381, 7
        %v1383 = vsub.s32 %v1380, %v1382
        %v1384 = vrot.slane %v1377, %v1383
        %1385 = vrot.lane.b32.xlu0 %v1384, 80
        %v1386 = vpop.permute.xlu0 %1385
        %vm1388 = vcmp.ge.s32.totalorder %v1304, 80
        %vm1389 = vcmp.lt.s32.totalorder %v1304, 96
        %vm1390 = vmand %vm1388, %vm1389
        %1391 = vst.msk [vmem:[#allocation3] sm:$0x1] %vm1390, %v1386
        %v1392 = vcombine.high %v1369, %v1369
        %1393 = vrot.lane.b32.xlu0 %v1392, 96
        %v1394 = vpop.permute.xlu0 %1393
        %vm1396 = vcmp.ge.s32.totalorder %v1304, 96
        %vm1397 = vcmp.lt.s32.totalorder %v1304, 112
        %vm1398 = vmand %vm1396, %vm1397
        %1399 = vst.msk [vmem:[#allocation3] sm:$0x1] %vm1398, %v1394
        %v1400 = vcombine.high %v1384, %v1384
        %1401 = vrot.lane.b32.xlu0 %v1400, 112
        %v1402 = vpop.permute.xlu0 %1401
        %vm1404 = vcmp.ge.s32.totalorder %v1304, 112
        %vm1405 = vcmp.lt.s32.totalorder %v1304, 128
        %vm1406 = vmand %vm1404, %vm1405
        %1407 = vst.msk [vmem:[#allocation3] sm:$0x1] %vm1406, %v1402
        %1408 = vst.msk [vmem:[#allocation3 + $0x1] sm:$0x1] %vm1307, %v1303
        %v1411 = vunpack.c.l.s4 1966171168
        %v1412 = vunpack.c.0.s8 %v1411
        %v1413 = vlaneseq
        %v1414 = vshrl.u32 %v1413, 7
        %v1415 = vsub.s32 %v1412, %v1414
        %v1416 = vrot.slane %v1303, %v1415
        %v1417 = vcombine.high %v1416, %v1416
        %v1419 = vunpack.c.l.s4 1966171168
        %v1420 = vunpack.c.0.s8 %v1419
        %v1421 = vlaneseq
        %v1422 = vshrl.u32 %v1421, 7
        %v1423 = vsub.s32 %v1420, %v1422
        %v1424 = vrot.slane %v1416, %v1423
        %v1426 = vunpack.c.l.s4 1966171168
        %v1427 = vunpack.c.0.s8 %v1426
        %v1428 = vlaneseq
        %v1429 = vshrl.u32 %v1428, 7
        %v1430 = vsub.s32 %v1427, %v1429
        %v1431 = vrot.slane %v1417, %v1430
        %1432 = vrot.lane.b32.xlu0 %v1431, 16
        %v1433 = vpop.permute.xlu0 %1432
        %1435 = vst.msk [vmem:[#allocation3 + $0x1] sm:$0x1] %vm1337, %v1433
        %v1436 = vcombine.high %v1424, %v1424
        %1437 = vrot.lane.b32.xlu0 %v1436, 32
        %v1438 = vpop.permute.xlu0 %1437
        %1440 = vst.msk [vmem:[#allocation3 + $0x1] sm:$0x1] %vm1345, %v1438
        %v1441 = vcombine.high %v1431, %v1431
        %1442 = vrot.lane.b32.xlu0 %v1441, 48
        %v1443 = vpop.permute.xlu0 %1442
        %1445 = vst.msk [vmem:[#allocation3 + $0x1] sm:$0x1] %vm1353, %v1443
        %v1446 = vcombine.high %v1303, %v1303
        %v1448 = vunpack.c.l.s4 1966171168
        %v1449 = vunpack.c.0.s8 %v1448
        %v1450 = vlaneseq
        %v1451 = vshrl.u32 %v1450, 7
        %v1452 = vsub.s32 %v1449, %v1451
        %v1453 = vrot.slane %v1446, %v1452
        %v1455 = vunpack.c.l.s4 1966171168
        %v1456 = vunpack.c.0.s8 %v1455
        %v1457 = vlaneseq
        %v1458 = vshrl.u32 %v1457, 7
        %v1459 = vsub.s32 %v1456, %v1458
        %v1460 = vrot.slane %v1453, %v1459
        %1461 = vrot.lane.b32.xlu0 %v1460, 64
        %v1462 = vpop.permute.xlu0 %1461
        %1464 = vst.msk [vmem:[#allocation3 + $0x1] sm:$0x1] %vm1375, %v1462
        %v1465 = vcombine.high %v1453, %v1453
        %v1467 = vunpack.c.l.s4 1966171168
        %v1468 = vunpack.c.0.s8 %v1467
        %v1469 = vlaneseq
        %v1470 = vshrl.u32 %v1469, 7
        %v1471 = vsub.s32 %v1468, %v1470
        %v1472 = vrot.slane %v1465, %v1471
        %1473 = vrot.lane.b32.xlu0 %v1472, 80
        %v1474 = vpop.permute.xlu0 %1473
        %1476 = vst.msk [vmem:[#allocation3 + $0x1] sm:$0x1] %vm1390, %v1474
        %v1477 = vcombine.high %v1460, %v1460
        %1478 = vrot.lane.b32.xlu0 %v1477, 96
        %v1479 = vpop.permute.xlu0 %1478
        %1481 = vst.msk [vmem:[#allocation3 + $0x1] sm:$0x1] %vm1398, %v1479
        %v1482 = vcombine.high %v1472, %v1472
        %1483 = vrot.lane.b32.xlu0 %v1482, 112
        %v1484 = vpop.permute.xlu0 %1483
        %1486 = vst.msk [vmem:[#allocation3 + $0x1] sm:$0x1] %vm1406, %v1484
        %v1487 = vld [vmem:[#allocation3] sm:$0x3]
        %v1489 = vlaneseq
        %v1490 = vshrl.u32 %v1489, 7
        %v1491 = vsub.s32 0, %v1490
        %v1492 = vrot.slane %v1487, %v1491
        %v1493 = vlaneseq
        %v1494 = vshrl.u32 %v1493, 7
        %v1495 = vsub.s32 1, %v1494
        %v1496 = vrot.slane %v1487, %v1495
        %v1499 = vmul.f32 %v373, %v1492
        %v1500 = vmul.f32 %v374, %v1496
        %v1501 = vmul.f32 %v375, %v1492
        %v1502 = vmul.f32 %v376, %v1496
        %v1503 = vmul.f32 %v377, %v1492
        %v1504 = vmul.f32 %v378, %v1496
        %v1505 = vmul.f32 %v379, %v1492
        %v1506 = vmul.f32 %v380, %v1496
        %1507 = vst [vmem:[%s257] sm:$0xff] %v1499
        %1508 = vst [vmem:[%s257 + $0x8] sm:$0xff] %v1500
        %1509 = vst [vmem:[%s257 + $0x10] sm:$0xff] %v1501
        %1510 = vst [vmem:[%s257 + $0x18] sm:$0xff] %v1502
        %1511 = vst [vmem:[%s257 + $0x20] sm:$0xff] %v1503
        %1512 = vst [vmem:[%s257 + $0x28] sm:$0xff] %v1504
        %1513 = vst [vmem:[%s257 + $0x30] sm:$0xff] %v1505
        %1514 = vst [vmem:[%s257 + $0x38] sm:$0xff] %v1506
        %s1515 = sand.u32 %s142, 1
        %s1516 = scalar_lea.sflag [#allocation7], %s1515
        %s1517 = sand.u32 %s142, 1
        %s1518 = smul.addr %s1517, 64
        %s1519 = scalar_lea.vmem [#allocation10], %s1518
        // Predicated region
        $region49: #{tpu_custom_call.1} parent=39 // pred_check
          %p1520 = pneg %p152
        $region50: #{tpu_custom_call.1} parent=39 // pred_check_branch
          %1522 = sbr.rel (%p1520) target = $region52
        $region51: #{tpu_custom_call.1} parent=39 // pred_region
          %s1524 = ssub.s32 1024, 1024
          %1525 = vsyncadd %s1516, %s1524
          %s1526 = smul.addr %s24, 8
          %s1527 = smul.addr %s1526, 128
          %s1528 = scalar_lea.hbm %s5, %s1527
          %s1529 = sshll.u32 %s1519, 4
          %s1530 = int_to_ptr.vmem [resolvable:$true] %s1529
          %1535 = dma.vmem_to_hbm [thread:$0]  %s1530, 1024, %s1528, %s1516, 256, 256, 16
        $region52: #{tpu_custom_call.1} parent=39 // pred_fallthru
          _
      $region40: #{tpu_custom_call.1} parent=5 // pred_fallthru
        _
      %p1536 = scmp.le.s32.totalorder 2, %s19
      // Predicated region
      $region53: #{tpu_custom_call.1} parent=5 // pred_check
        %p1537 = pneg %p1536
      $region54: #{tpu_custom_call.1} parent=5 // pred_check_branch
        %1539 = sbr.rel (%p1537) target = $region56
      $region55: #{tpu_custom_call.1} parent=5 // pred_region
        %s1540 = ssub.s32 %s19, 2
        // Predicated region
        $region57: #{tpu_custom_call.1} parent=55 // pred_check
          %p1541 = pneg %p158
        $region58: #{tpu_custom_call.1} parent=55 // pred_check_branch
          %1543 = sbr.rel (%p1541) target = $region60
        $region59: #{tpu_custom_call.1} parent=55 // pred_region
          %s1544 = sand.u32 %s143, 1
          %s1545 = scalar_lea.sflag [#allocation7], %s1544
          %s1546 = sand.u32 %s143, 1
          %s1547 = smul.addr %s1546, 64
          %s1548 = scalar_lea.vmem [#allocation10], %s1547
          %1549 = dma.done %s1545, 1024
        $region60: #{tpu_custom_call.1} parent=55 // pred_fallthru
          _
      $region56: #{tpu_custom_call.1} parent=5 // pred_fallthru
        _
    $region6: #{tpu_custom_call.1} parent=1 // loop_footer
      %s23 = sadd.s32 1, %s19
    $region7: #{tpu_custom_call.1} parent=1 // loop_footer_branch
      %18 = sbr.rel target = $region3
    $region8: #{tpu_custom_call.1} parent=1 // loop_exit
      _
    %1550 = vsyncpa [#allocation6], 1
    %s1551 = scalar_lea.sflag [#allocation6], 1
    %1552 = vsyncpa %s1551, 1
    %1553 = vsyncpa [#allocation7], 1
    %s1554 = scalar_lea.sflag [#allocation7], 1
    %1555 = vsyncpa %s1554, 1
    %1556 = vsyncpa [#allocation8], 1
    %s1557 = scalar_lea.sflag [#allocation8], 1
    %1558 = vsyncpa %s1557, 1

</llo_original>
